<compile_context>
chip_gen: v6e
topology: v6e:2x2x1
jax: 0.10.0
libtpu: 0.0.40
codegen_flags: <defaults>
</compile_context>

<pallas_src>
import functools

import jax
import jax.numpy as jnp
from jax.experimental import pallas as pl
from jax.experimental.pallas import tpu as pltpu


def _wsconv2d_kernel(x_ref, w_ref, b_ref, o_ref, xpad_ref, cols_ref,
                     *, H, W, K, pad):
    # x_ref:    (1, H, W, Cin)        one un-padded NHWC image
    # w_ref:    (Cout, K*K*Cin)       scale-folded weight, (kh, kw, ci) minor
    # b_ref:    (Cout, 1)             bias column (broadcasts along lanes)
    # o_ref:    (1, Cout, H*W)        lane-dense output (reshapes to NCHW)
    # xpad_ref: VMEM (H+2p, W+2p, Cin)  zero-padded staging buffer
    # cols_ref: VMEM (H*W, K*K*Cin)     im2col buffer
    cin = x_ref.shape[-1]

    # In-kernel zero padding: zero the staging buffer (tiny) and write the
    # interior.  Doing this in VMEM avoids an extra padded HBM copy of x.
    xpad_ref[...] = jnp.zeros_like(xpad_ref)
    xpad_ref[pad:pad + H, pad:pad + W, :] = x_ref[0]

    # im2col: gather the K*K taps onto the contraction (lane) axis of `cols`,
    # so the whole conv becomes a single MXU matmul instead of K*K tiny ones.
    for kh in range(K):
        for kw in range(K):
            tap = kh * K + kw
            patch = xpad_ref[kh:kh + H, kw:kw + W, :].reshape(H * W, cin)
            cols_ref[:, tap * cin:(tap + 1) * cin] = patch

    # (Cout, K*K*Cin) x (H*W, K*K*Cin)^T -> (Cout, H*W)   [q @ k.T pattern]
    acc = jax.lax.dot_general(
        w_ref[...], cols_ref[...],
        dimension_numbers=(((1,), (1,)), ((), ())),
        preferred_element_type=jnp.float32)

    # Bias broadcast over the lane (spatial) axis; store is lane-dense.
    o_ref[0] = (acc + b_ref[...]).astype(o_ref.dtype)


def wsconv2d(x_nchw, weight_oihw, bias, *, stride=1, padding=1):
    """Forward of WSConv2d. x_nchw: (N, Cin, H, W); weight_oihw: (Cout, Cin, K, K)."""
    assert stride == 1, "WSConv2d reference uses stride=1"
    N, Cin, H, W = x_nchw.shape
    Cout, Cin_w, K, K2 = weight_oihw.shape
    assert Cin_w == Cin and K == K2

    scale = (2.0 / (Cin * K * K)) ** 0.5

    # Fold the equalized-LR scale into the weight (done once on K*K*Cin*Cout
    # values instead of per-pixel on the activations).  Reorder OIHW ->
    # (Cout, kh, kw, ci) flattened to match the im2col column ordering.
    w_mat = weight_oihw.astype(jnp.float32) * jnp.float32(scale)
    w_mat = jnp.transpose(w_mat, (0, 2, 3, 1)).reshape(Cout, K * K * Cin)
    b_col = bias.astype(jnp.float32).reshape(Cout, 1)

    # NHWC for the kernel (channels on lanes); no jnp.pad -- padding is done
    # inside the kernel in VMEM.
    x_nhwc = jnp.transpose(x_nchw, (0, 2, 3, 1)).astype(jnp.float32)

    Hp, Wp = H + 2 * padding, W + 2 * padding
    HW = H * W

    kernel = functools.partial(_wsconv2d_kernel, H=H, W=W, K=K, pad=padding)

    flops = 2 * N * HW * K * K * Cin * Cout
    bytes_accessed = 4 * (N * H * W * Cin + Cout * K * K * Cin + Cout
                          + N * Cout * HW)

    out = pl.pallas_call(
        kernel,
        out_shape=jax.ShapeDtypeStruct((N, Cout, HW), jnp.float32),
        grid_spec=pltpu.PrefetchScalarGridSpec(
            num_scalar_prefetch=0,
            grid=(N,),
            in_specs=[
                pl.BlockSpec((1, H, W, Cin), lambda n: (n, 0, 0, 0)),
                pl.BlockSpec((Cout, K * K * Cin), lambda n: (0, 0)),
                pl.BlockSpec((Cout, 1), lambda n: (0, 0)),
            ],
            out_specs=pl.BlockSpec((1, Cout, HW), lambda n: (n, 0, 0)),
            scratch_shapes=[
                pltpu.VMEM((Hp, Wp, Cin), jnp.float32),       # padded image
                pltpu.VMEM((HW, K * K * Cin), jnp.float32),   # im2col columns
            ],
        ),
        compiler_params=pltpu.CompilerParams(
            dimension_semantics=("parallel",)),
        cost_estimate=pl.CostEstimate(flops=flops, transcendentals=0,
                                      bytes_accessed=bytes_accessed),
    )(x_nhwc, w_mat, b_col)

    # (N, Cout, H*W) is already channel-major: a free reshape gives NCHW.
    return out.reshape(N, Cout, H, W)


def _reference(x_nchw, weight_oihw, bias):
    """Pure-JAX reference matching the PyTorch forward."""
    Cin, K = weight_oihw.shape[1], weight_oihw.shape[2]
    scale = (2.0 / (Cin * K * K)) ** 0.5
    out = jax.lax.conv_general_dilated(
        x_nchw * scale, weight_oihw,
        window_strides=(1, 1), padding=((1, 1), (1, 1)),
        dimension_numbers=("NCHW", "OIHW", "NCHW"))
    return out + bias.reshape(1, -1, 1, 1)


if __name__ == "__main__":
    key = jax.random.PRNGKey(0)
    k_x, k_w, k_b = jax.random.split(key, 3)

    N, Cin, H, W = 2, 4, 16, 16
    Cout, K = 8, 3

    x = jax.random.normal(k_x, (N, Cin, H, W), dtype=jnp.float32)
    # Module init uses nn.init.normal_(weight), nn.init.zeros_(bias); a nonzero
    # bias is used here so the bias-add path of forward() is actually exercised.
    weight = jax.random.normal(k_w, (Cout, Cin, K, K), dtype=jnp.float32)
    bias = 0.1 * jax.random.normal(k_b, (Cout,), dtype=jnp.float32)

    out = wsconv2d(x, weight, bias)
    out = jax.block_until_ready(out)

    ref = _reference(x, weight, bias)
    assert out.shape == (N, Cout, H, W)
    assert jnp.allclose(out, ref, atol=1e-4, rtol=1e-4), "mismatch vs reference conv"

    print("KERNEL_OK")
</pallas_src>

<mosaic_0001>
module attributes {stable_mosaic.version = 11 : i64} {
  func.func @_wsconv2d_kernel(%arg0: i32, %arg1: memref<1x16x16x4xf32, #tpu.memory_space<vmem>>, %arg2: memref<8x36xf32, #tpu.memory_space<vmem>>, %arg3: memref<8x1xf32, #tpu.memory_space<vmem>>, %arg4: memref<1x8x256xf32, #tpu.memory_space<vmem>>, %arg5: memref<18x18x4xf32, #tpu.memory_space<vmem>>, %arg6: memref<256x36xf32, #tpu.memory_space<vmem>>) attributes {dimension_semantics = [#tpu.dimension_semantics<parallel>], iteration_bounds = array<i64: 2>, scalar_prefetch = 0 : i64, scratch_operands = 2 : i64, tpu.core_type = #tpu.core_type<tc>, window_params = [{transform_indices = @transform_0, window_bounds = array<i64: 1, 16, 16, 4>}, {pipeline_mode = #tpu.pipeline_mode<synchronous>, transform_indices = @transform_1, window_bounds = array<i64: 8, 36>}, {pipeline_mode = #tpu.pipeline_mode<synchronous>, transform_indices = @transform_2, window_bounds = array<i64: 8, 1>}, {transform_indices = @transform_3, window_bounds = array<i64: 1, 8, 256>}]} {
    %cst = arith.constant 0.000000e+00 : f32
    %0 = vector.broadcast %cst : f32 to vector<18x18x4xf32>
    %c0 = arith.constant 0 : index
    %c0_0 = arith.constant 0 : index
    %c0_1 = arith.constant 0 : index
    %1 = vector.load %arg5[%c0, %c0_0, %c0_1] : memref<18x18x4xf32, #tpu.memory_space<vmem>>, vector<18x18x4xf32>
    tpu.vector_store %arg5[%c0, %c0_0, %c0_1], %0 {strides = array<i32>} : memref<18x18x4xf32, #tpu.memory_space<vmem>>, vector<18x18x4xf32>,
    %c0_2 = arith.constant 0 : index
    %c0_3 = arith.constant 0 : index
    %c0_4 = arith.constant 0 : index
    %c0_5 = arith.constant 0 : index
    %2 = vector.load %arg1[%c0_2, %c0_3, %c0_4, %c0_5] : memref<1x16x16x4xf32, #tpu.memory_space<vmem>>, vector<1x16x16x4xf32>
    %3 = vector.shape_cast %2 : vector<1x16x16x4xf32> to vector<16x16x4xf32>
    %c1 = arith.constant 1 : index
    %c1_6 = arith.constant 1 : index
    %c0_7 = arith.constant 0 : index
    %4 = vector.load %arg5[%c1, %c1_6, %c0_7] : memref<18x18x4xf32, #tpu.memory_space<vmem>>, vector<16x16x4xf32>
    tpu.vector_store %arg5[%c1, %c1_6, %c0_7], %3 {strides = array<i32>} : memref<18x18x4xf32, #tpu.memory_space<vmem>>, vector<16x16x4xf32>,
    %c0_8 = arith.constant 0 : index
    %c0_9 = arith.constant 0 : index
    %c0_10 = arith.constant 0 : index
    %5 = vector.load %arg5[%c0_8, %c0_9, %c0_10] : memref<18x18x4xf32, #tpu.memory_space<vmem>>, vector<16x16x4xf32>
    %6 = vector.shape_cast %5 : vector<16x16x4xf32> to vector<256x4xf32>
    %c0_11 = arith.constant 0 : index
    %c0_12 = arith.constant 0 : index
    %7 = vector.load %arg6[%c0_11, %c0_12] : memref<256x36xf32, #tpu.memory_space<vmem>>, vector<256x4xf32>
    tpu.vector_store %arg6[%c0_11, %c0_12], %6 {strides = array<i32>} : memref<256x36xf32, #tpu.memory_space<vmem>>, vector<256x4xf32>,
    %c0_13 = arith.constant 0 : index
    %c1_14 = arith.constant 1 : index
    %c0_15 = arith.constant 0 : index
    %8 = vector.load %arg5[%c0_13, %c1_14, %c0_15] : memref<18x18x4xf32, #tpu.memory_space<vmem>>, vector<16x16x4xf32>
    %9 = vector.shape_cast %8 : vector<16x16x4xf32> to vector<256x4xf32>
    %c0_16 = arith.constant 0 : index
    %c4 = arith.constant 4 : index
    %10 = vector.load %arg6[%c0_16, %c4] : memref<256x36xf32, #tpu.memory_space<vmem>>, vector<256x4xf32>
    tpu.vector_store %arg6[%c0_16, %c4], %9 {strides = array<i32>} : memref<256x36xf32, #tpu.memory_space<vmem>>, vector<256x4xf32>,
    %c0_17 = arith.constant 0 : index
    %c2 = arith.constant 2 : index
    %c0_18 = arith.constant 0 : index
    %11 = vector.load %arg5[%c0_17, %c2, %c0_18] : memref<18x18x4xf32, #tpu.memory_space<vmem>>, vector<16x16x4xf32>
    %12 = vector.shape_cast %11 : vector<16x16x4xf32> to vector<256x4xf32>
    %c0_19 = arith.constant 0 : index
    %c8 = arith.constant 8 : index
    %13 = vector.load %arg6[%c0_19, %c8] : memref<256x36xf32, #tpu.memory_space<vmem>>, vector<256x4xf32>
    tpu.vector_store %arg6[%c0_19, %c8], %12 {strides = array<i32>} : memref<256x36xf32, #tpu.memory_space<vmem>>, vector<256x4xf32>,
    %c1_20 = arith.constant 1 : index
    %c0_21 = arith.constant 0 : index
    %c0_22 = arith.constant 0 : index
    %14 = vector.load %arg5[%c1_20, %c0_21, %c0_22] : memref<18x18x4xf32, #tpu.memory_space<vmem>>, vector<16x16x4xf32>
    %15 = vector.shape_cast %14 : vector<16x16x4xf32> to vector<256x4xf32>
    %c0_23 = arith.constant 0 : index
    %c12 = arith.constant 12 : index
    %16 = vector.load %arg6[%c0_23, %c12] : memref<256x36xf32, #tpu.memory_space<vmem>>, vector<256x4xf32>
    tpu.vector_store %arg6[%c0_23, %c12], %15 {strides = array<i32>} : memref<256x36xf32, #tpu.memory_space<vmem>>, vector<256x4xf32>,
    %c1_24 = arith.constant 1 : index
    %c1_25 = arith.constant 1 : index
    %c0_26 = arith.constant 0 : index
    %17 = vector.load %arg5[%c1_24, %c1_25, %c0_26] : memref<18x18x4xf32, #tpu.memory_space<vmem>>, vector<16x16x4xf32>
    %18 = vector.shape_cast %17 : vector<16x16x4xf32> to vector<256x4xf32>
    %c0_27 = arith.constant 0 : index
    %c16 = arith.constant 16 : index
    %19 = vector.load %arg6[%c0_27, %c16] : memref<256x36xf32, #tpu.memory_space<vmem>>, vector<256x4xf32>
    tpu.vector_store %arg6[%c0_27, %c16], %18 {strides = array<i32>} : memref<256x36xf32, #tpu.memory_space<vmem>>, vector<256x4xf32>,
    %c1_28 = arith.constant 1 : index
    %c2_29 = arith.constant 2 : index
    %c0_30 = arith.constant 0 : index
    %20 = vector.load %arg5[%c1_28, %c2_29, %c0_30] : memref<18x18x4xf32, #tpu.memory_space<vmem>>, vector<16x16x4xf32>
    %21 = vector.shape_cast %20 : vector<16x16x4xf32> to vector<256x4xf32>
    %c0_31 = arith.constant 0 : index
    %c20 = arith.constant 20 : index
    %22 = vector.load %arg6[%c0_31, %c20] : memref<256x36xf32, #tpu.memory_space<vmem>>, vector<256x4xf32>
    tpu.vector_store %arg6[%c0_31, %c20], %21 {strides = array<i32>} : memref<256x36xf32, #tpu.memory_space<vmem>>, vector<256x4xf32>,
    %c2_32 = arith.constant 2 : index
    %c0_33 = arith.constant 0 : index
    %c0_34 = arith.constant 0 : index
    %23 = vector.load %arg5[%c2_32, %c0_33, %c0_34] : memref<18x18x4xf32, #tpu.memory_space<vmem>>, vector<16x16x4xf32>
    %24 = vector.shape_cast %23 : vector<16x16x4xf32> to vector<256x4xf32>
    %c0_35 = arith.constant 0 : index
    %c24 = arith.constant 24 : index
    %25 = vector.load %arg6[%c0_35, %c24] : memref<256x36xf32, #tpu.memory_space<vmem>>, vector<256x4xf32>
    tpu.vector_store %arg6[%c0_35, %c24], %24 {strides = array<i32>} : memref<256x36xf32, #tpu.memory_space<vmem>>, vector<256x4xf32>,
    %c2_36 = arith.constant 2 : index
    %c1_37 = arith.constant 1 : index
    %c0_38 = arith.constant 0 : index
    %26 = vector.load %arg5[%c2_36, %c1_37, %c0_38] : memref<18x18x4xf32, #tpu.memory_space<vmem>>, vector<16x16x4xf32>
    %27 = vector.shape_cast %26 : vector<16x16x4xf32> to vector<256x4xf32>
    %c0_39 = arith.constant 0 : index
    %c28 = arith.constant 28 : index
    %28 = vector.load %arg6[%c0_39, %c28] : memref<256x36xf32, #tpu.memory_space<vmem>>, vector<256x4xf32>
    tpu.vector_store %arg6[%c0_39, %c28], %27 {strides = array<i32>} : memref<256x36xf32, #tpu.memory_space<vmem>>, vector<256x4xf32>,
    %c2_40 = arith.constant 2 : index
    %c2_41 = arith.constant 2 : index
    %c0_42 = arith.constant 0 : index
    %29 = vector.load %arg5[%c2_40, %c2_41, %c0_42] : memref<18x18x4xf32, #tpu.memory_space<vmem>>, vector<16x16x4xf32>
    %30 = vector.shape_cast %29 : vector<16x16x4xf32> to vector<256x4xf32>
    %c0_43 = arith.constant 0 : index
    %c32 = arith.constant 32 : index
    %31 = vector.load %arg6[%c0_43, %c32] : memref<256x36xf32, #tpu.memory_space<vmem>>, vector<256x4xf32>
    tpu.vector_store %arg6[%c0_43, %c32], %30 {strides = array<i32>} : memref<256x36xf32, #tpu.memory_space<vmem>>, vector<256x4xf32>,
    %c0_44 = arith.constant 0 : index
    %c0_45 = arith.constant 0 : index
    %32 = vector.load %arg2[%c0_44, %c0_45] : memref<8x36xf32, #tpu.memory_space<vmem>>, vector<8x36xf32>
    %c0_46 = arith.constant 0 : index
    %c0_47 = arith.constant 0 : index
    %33 = vector.load %arg6[%c0_46, %c0_47] : memref<256x36xf32, #tpu.memory_space<vmem>>, vector<256x36xf32>
    %cst_48 = arith.constant dense<0.000000e+00> : vector<8x256xf32>
    %34 = tpu.matmul %32, %33, %cst_48 {dimension_numbers = #tpu.dot_dimension_numbers<[1], [1], [0], [0], [0, 0, 1, 0], [], []>} : vector<8x36xf32>, vector<256x36xf32>, vector<8x256xf32> -> vector<8x256xf32>
    %c0_49 = arith.constant 0 : index
    %c0_50 = arith.constant 0 : index
    %35 = vector.load %arg3[%c0_49, %c0_50] : memref<8x1xf32, #tpu.memory_space<vmem>>, vector<8x1xf32>
    %36 = vector.broadcast %35 : vector<8x1xf32> to vector<8x256xf32>
    %37 = arith.addf %34, %36 : vector<8x256xf32>
    %c0_51 = arith.constant 0 : index
    %c0_52 = arith.constant 0 : index
    %c0_53 = arith.constant 0 : index
    %38 = vector.load %arg4[%c0_51, %c0_52, %c0_53] : memref<1x8x256xf32, #tpu.memory_space<vmem>>, vector<1x8x256xf32>
    %39 = vector.shape_cast %38 : vector<1x8x256xf32> to vector<8x256xf32>
    %40 = vector.shape_cast %37 : vector<8x256xf32> to vector<1x8x256xf32>
    tpu.vector_store %arg4[%c0_51, %c0_52, %c0_53], %40 {strides = array<i32>} : memref<1x8x256xf32, #tpu.memory_space<vmem>>, vector<1x8x256xf32>,
    return
  }
  func.func @transform_0(%arg0: i32) -> (i32, i32, i32, i32) {
    %c0_i32 = arith.constant 0 : i32
    %c0_i32_0 = arith.constant 0 : i32
    %c0_i32_1 = arith.constant 0 : i32
    %c0_i32_2 = arith.constant 0 : i32
    return %arg0, %c0_i32, %c0_i32_0, %c0_i32_1 : i32, i32, i32, i32
  }
  func.func @transform_1(%arg0: i32) -> (i32, i32) {
    %c0_i32 = arith.constant 0 : i32
    %c0_i32_0 = arith.constant 0 : i32
    %c0_i32_1 = arith.constant 0 : i32
    return %c0_i32, %c0_i32_0 : i32, i32
  }
  func.func @transform_2(%arg0: i32) -> (i32, i32) {
    %c0_i32 = arith.constant 0 : i32
    %c0_i32_0 = arith.constant 0 : i32
    %c0_i32_1 = arith.constant 0 : i32
    return %c0_i32, %c0_i32_0 : i32, i32
  }
  func.func @transform_3(%arg0: i32) -> (i32, i32, i32) {
    %c0_i32 = arith.constant 0 : i32
    %c0_i32_0 = arith.constant 0 : i32
    %c0_i32_1 = arith.constant 0 : i32
    return %arg0, %c0_i32, %c0_i32_0 : i32, i32, i32
  }
}

</mosaic_0001>

<llo_original>
// kernel: tpu_custom_call.1
$region0: #{tpu_custom_call.1}
  #allocation0 [shape = 'u32[]', space=smem, size = 0x4, offset = 0x4, fixed_abs, tag = 'smem constant byte address 0x4 - core index']
  #allocation1 [shape = 'u32[144,128]{1,0:T(1,128)}', space=vmem, size = 0x12000, scoped, tag = 'internal scratch']
  #allocation2 [shape = 'f32[18,18,4]{2,1,0:T(8,128)}', space=vmem, size = 0x36000, scoped, tag = 'scratch operand']
  #allocation3 [shape = 'f32[256,36]{1,0:T(8,128)}', space=vmem, size = 0x20000, scoped, tag = 'scratch operand']
  %s0 = inlined_call_operand.vmem [shape: f32[2,16,16,4], index: 0, kind: input, shape index: {}]
  %s1 = inlined_call_operand.vmem [shape: f32[8,36], index: 1, kind: input, shape index: {}]
  %s2 = inlined_call_operand.vmem [shape: f32[8,1], index: 2, kind: input, shape index: {}]
  %s3 = inlined_call_operand.hbm [shape: f32[2,8,256], index: 3, kind: output, shape index: {}]
  %s4 = sld [smem:[#allocation0]]
  $region45: #{tpu_custom_call.1} parent=0
    _
  %s6 = ssub.s32 1, %s4
  %s7 = scalar_select 0, %s6, %s4
  $region1: #{tpu_custom_call.1} parent=0
    #allocation4 [shape = 'u8[16384]{0}', space=vmem, size = 0x4000, scoped, tag = 'output window, operand 0']
    #allocation5 [shape = 's32[2]{0}', space=sflag, size = 0x8, scoped, tag = 'scoped memory for tpu_custom_call.1']
    %8 = vsyncpa [#allocation5], 0
    %s9 = scalar_lea.sflag [#allocation5], 1
    %10 = vsyncpa %s9, 0
    loop: start=0, step=1, limit=4
    $region2: #{tpu_custom_call.1} parent=1 // loop_pre_header
      _
    $region3: #{tpu_custom_call.1} parent=1 // loop_header
      %s12 = sphi 0, %s16
      %p13 = scmp.ge.s32.totalorder %s12, 4
      %s22 = sphi 0, %s24
      %s25 = sphi 0, %s22
      %s26 = sphi 0, %s25
      %s42 = sphi 0, %s26
      %s46 = sphi 0, %s46
      %s48 = sphi 0, %s46
      %s49 = sphi 0, %s48
      %s63 = sphi 0, %s49
      %s67 = sphi 0, %s67
      %s69 = sphi 0, %s67
      %s70 = sphi 0, %s69
      %s84 = sphi 0, %s70
      %s90 = sphi 0, %s92
      %s93 = sphi 0, %s90
      %s94 = sphi 0, %s93
      %s110 = sphi 0, %s94
    $region4: #{tpu_custom_call.1} parent=1 // loop_header_branch
      %15 = sbr.rel (%p13) target = $region8
    $region5: #{tpu_custom_call.1} parent=1 // loop_body
      %s17 = ssub.s32 %s12, 1
      %s18 = ssub.s32 %s12, 2
      %s19 = sadd.s32 %s12, 1
      %s20 = ssub.s32 %s12, %s19
      %p21 = scmp.eq.s32.totalorder %s20, 0
      %s23 = sadd.s32 %s22, 1
      %s24 = scalar_select %p21, %s22, %s23
      %p27 = pneg %p21
      %p28 = scmp.eq.s32.totalorder %s12, 1
      %p29 = por %p27, %p28
      %p30 = scmp.ne.s32.totalorder %s22, %s25
      %p31 = scmp.eq.s32.totalorder %s12, 0
      %p32 = por %p30, %p31
      %p33 = scmp.ne.s32.totalorder %s22, %s25
      %p34 = scmp.eq.s32.totalorder %s17, 1
      %p35 = por %p33, %p34
      %p36 = scmp.ne.s32.totalorder %s25, %s26
      %p37 = scmp.eq.s32.totalorder %s17, 0
      %p38 = por %p36, %p37
      %p39 = scmp.ne.s32.totalorder %s25, %s26
      %p40 = scmp.eq.s32.totalorder %s18, 1
      %p41 = por %p39, %p40
      %p43 = scmp.ne.s32.totalorder %s26, %s42
      %p44 = scmp.eq.s32.totalorder %s18, 0
      %p45 = por %p43, %p44
      %s47 = sadd.s32 %s46, 1
      %p50 = scmp.eq.s32.totalorder %s12, 1
      %p51 = scmp.ne.s32.totalorder %s46, %s48
      %p52 = scmp.eq.s32.totalorder %s12, 0
      %p53 = por %p51, %p52
      %p54 = scmp.ne.s32.totalorder %s46, %s48
      %p55 = scmp.eq.s32.totalorder %s17, 1
      %p56 = por %p54, %p55
      %p57 = scmp.ne.s32.totalorder %s48, %s49
      %p58 = scmp.eq.s32.totalorder %s17, 0
      %p59 = por %p57, %p58
      %p60 = scmp.ne.s32.totalorder %s48, %s49
      %p61 = scmp.eq.s32.totalorder %s18, 1
      %p62 = por %p60, %p61
      %p64 = scmp.ne.s32.totalorder %s49, %s63
      %p65 = scmp.eq.s32.totalorder %s18, 0
      %p66 = por %p64, %p65
      %s68 = sadd.s32 %s67, 1
      %p71 = scmp.eq.s32.totalorder %s12, 1
      %p72 = scmp.ne.s32.totalorder %s67, %s69
      %p73 = scmp.eq.s32.totalorder %s12, 0
      %p74 = por %p72, %p73
      %p75 = scmp.ne.s32.totalorder %s67, %s69
      %p76 = scmp.eq.s32.totalorder %s17, 1
      %p77 = por %p75, %p76
      %p78 = scmp.ne.s32.totalorder %s69, %s70
      %p79 = scmp.eq.s32.totalorder %s17, 0
      %p80 = por %p78, %p79
      %p81 = scmp.ne.s32.totalorder %s69, %s70
      %p82 = scmp.eq.s32.totalorder %s18, 1
      %p83 = por %p81, %p82
      %p85 = scmp.ne.s32.totalorder %s70, %s84
      %p86 = scmp.eq.s32.totalorder %s18, 0
      %p87 = por %p85, %p86
      %s88 = ssub.s32 %s12, %s19
      %p89 = scmp.eq.s32.totalorder %s88, 0
      %s91 = sadd.s32 %s90, 1
      %s92 = scalar_select %p89, %s90, %s91
      %p95 = pneg %p89
      %p96 = scmp.eq.s32.totalorder %s12, 1
      %p97 = por %p95, %p96
      %p98 = scmp.ne.s32.totalorder %s90, %s93
      %p99 = scmp.eq.s32.totalorder %s12, 0
      %p100 = por %p98, %p99
      %p101 = scmp.ne.s32.totalorder %s90, %s93
      %p102 = scmp.eq.s32.totalorder %s17, 1
      %p103 = por %p101, %p102
      %p104 = scmp.ne.s32.totalorder %s93, %s94
      %p105 = scmp.eq.s32.totalorder %s17, 0
      %p106 = por %p104, %p105
      %p107 = scmp.ne.s32.totalorder %s93, %s94
      %p108 = scmp.eq.s32.totalorder %s18, 1
      %p109 = por %p107, %p108
      %p111 = scmp.ne.s32.totalorder %s94, %s110
      %p112 = scmp.eq.s32.totalorder %s18, 0
      %p113 = por %p111, %p112
      %p114 = scmp.le.s32.totalorder 1, %s12
      %p115 = scmp.lt.s32.totalorder %s12, 3
      %p116 = pnand %p114, %p115
      %p117 = pneg %p116
      // Predicated region
      $region9: #{tpu_custom_call.1} parent=5 // pred_check
        _
      $region10: #{tpu_custom_call.1} parent=5 // pred_check_branch
        %119 = sbr.rel (%p116) target = $region12
      $region11: #{tpu_custom_call.1} parent=5 // pred_region
        %s120 = ssub.s32 %s12, 1
        // Predicated region
        $region13: #{tpu_custom_call.1} parent=11 // pred_check
          %p121 = pneg %p59
        $region14: #{tpu_custom_call.1} parent=11 // pred_check_branch
          %123 = sbr.rel (%p121) target = $region16
        $region15: #{tpu_custom_call.1} parent=11 // pred_region
          _
        $region16: #{tpu_custom_call.1} parent=11 // pred_fallthru
          _
        // Predicated region
        $region17: #{tpu_custom_call.1} parent=11 // pred_check
          %p124 = pneg %p80
        $region18: #{tpu_custom_call.1} parent=11 // pred_check_branch
          %126 = sbr.rel (%p124) target = $region20
        $region19: #{tpu_custom_call.1} parent=11 // pred_region
          _
        $region20: #{tpu_custom_call.1} parent=11 // pred_fallthru
          _
      $region12: #{tpu_custom_call.1} parent=5 // pred_fallthru
        _
      %p127 = scmp.lt.s32.totalorder %s12, 2
      // Predicated region
      $region21: #{tpu_custom_call.1} parent=5 // pred_check
        %p128 = pneg %p127
      $region22: #{tpu_custom_call.1} parent=5 // pred_check_branch
        %130 = sbr.rel (%p128) target = $region24
      $region23: #{tpu_custom_call.1} parent=5 // pred_region
        // Predicated region
        $region25: #{tpu_custom_call.1} parent=23 // pred_check
          %p131 = pneg %p32
        $region26: #{tpu_custom_call.1} parent=23 // pred_check_branch
          %133 = sbr.rel (%p131) target = $region28
        $region27: #{tpu_custom_call.1} parent=23 // pred_region
          %p134 = scmp.lt.s32.totalorder %s12, 1
          %s135 = scalar_select %p134, %s12, 1
          %s136 = smul.addr %s135, 32
          %s137 = smul.addr %s136, 8
          %s138 = scalar_lea.vmem %s0, %s137
        $region28: #{tpu_custom_call.1} parent=23 // pred_fallthru
          _
      $region24: #{tpu_custom_call.1} parent=5 // pred_fallthru
        _
      %p139 = scmp.le.s32.totalorder 1, %s12
      %p140 = scmp.lt.s32.totalorder %s12, 3
      %p141 = pnand %p139, %p140
      %p142 = pneg %p141
      // Predicated region
      $region29: #{tpu_custom_call.1} parent=5 // pred_check
        _
      $region30: #{tpu_custom_call.1} parent=5 // pred_check_branch
        %144 = sbr.rel (%p141) target = $region32
      $region31: #{tpu_custom_call.1} parent=5 // pred_region
        %s145 = ssub.s32 %s12, 1
        %p146 = scmp.lt.s32.totalorder %s17, 1
        %s147 = scalar_select %p146, %s17, 1
        %s148 = smul.addr %s147, 32
        %s149 = smul.addr %s148, 8
        %s150 = scalar_lea.vmem %s0, %s149
        %p151 = pneg %p38
        %p152 = pneg %p35
        %p153 = pneg %p59
        %p154 = pneg %p56
        %p155 = pneg %p80
        %p156 = pneg %p77
        %p157 = pneg %p106
        %p158 = pneg %p103
        %s159 = sand.u32 %s93, 1
        %s160 = scalar_lea.sflag [#allocation5], %s159
        %s161 = sand.u32 %s93, 1
        %s162 = smul.addr %s161, 16
        %s163 = scalar_lea.vmem [#allocation4], %s162
        %p164 = scmp.lt.s32.totalorder %s17, 1
        %s165 = scalar_select %p164, %s17, 1
        %s166 = smul.addr %s165, 32
        %s167 = smul.addr %s166, 8
        %s168 = scalar_lea.vmem %s0, %s167
        %vm169 = vcmask 31744
        %170 = vst.msk [vmem:[#allocation2] sm:$0xff] %vm169, 0.0
        %171 = vst.msk [vmem:[#allocation2 + $0x8] sm:$0xff] %vm169, 0.0
        %vm172 = vcmask 25600
        %173 = vst.msk [vmem:[#allocation2 + $0x10] sm:$0x3] %vm172, 0.0
        %174 = vst.msk [vmem:[#allocation2 + $0x18] sm:$0xff] %vm169, 0.0
        %175 = vst.msk [vmem:[#allocation2 + $0x20] sm:$0xff] %vm169, 0.0
        %176 = vst.msk [vmem:[#allocation2 + $0x28] sm:$0x3] %vm172, 0.0
        %177 = vst.msk [vmem:[#allocation2 + $0x30] sm:$0xff] %vm169, 0.0
        %178 = vst.msk [vmem:[#allocation2 + $0x38] sm:$0xff] %vm169, 0.0
        %179 = vst.msk [vmem:[#allocation2 + $0x40] sm:$0x3] %vm172, 0.0
        %180 = vst.msk [vmem:[#allocation2 + $0x48] sm:$0xff] %vm169, 0.0
        %181 = vst.msk [vmem:[#allocation2 + $0x50] sm:$0xff] %vm169, 0.0
        %182 = vst.msk [vmem:[#allocation2 + $0x58] sm:$0x3] %vm172, 0.0
        %183 = vst.msk [vmem:[#allocation2 + $0x60] sm:$0xff] %vm169, 0.0
        %184 = vst.msk [vmem:[#allocation2 + $0x68] sm:$0xff] %vm169, 0.0
        %185 = vst.msk [vmem:[#allocation2 + $0x70] sm:$0x3] %vm172, 0.0
        %186 = vst.msk [vmem:[#allocation2 + $0x78] sm:$0xff] %vm169, 0.0
        %187 = vst.msk [vmem:[#allocation2 + $0x80] sm:$0xff] %vm169, 0.0
        %188 = vst.msk [vmem:[#allocation2 + $0x88] sm:$0x3] %vm172, 0.0
        %189 = vst.msk [vmem:[#allocation2 + $0x90] sm:$0xff] %vm169, 0.0
        %190 = vst.msk [vmem:[#allocation2 + $0x98] sm:$0xff] %vm169, 0.0
        %191 = vst.msk [vmem:[#allocation2 + $0xa0] sm:$0x3] %vm172, 0.0
        %192 = vst.msk [vmem:[#allocation2 + $0xa8] sm:$0xff] %vm169, 0.0
        %193 = vst.msk [vmem:[#allocation2 + $0xb0] sm:$0xff] %vm169, 0.0
        %194 = vst.msk [vmem:[#allocation2 + $0xb8] sm:$0x3] %vm172, 0.0
        %195 = vst.msk [vmem:[#allocation2 + $0xc0] sm:$0xff] %vm169, 0.0
        %196 = vst.msk [vmem:[#allocation2 + $0xc8] sm:$0xff] %vm169, 0.0
        %197 = vst.msk [vmem:[#allocation2 + $0xd0] sm:$0x3] %vm172, 0.0
        %198 = vst.msk [vmem:[#allocation2 + $0xd8] sm:$0xff] %vm169, 0.0
        %199 = vst.msk [vmem:[#allocation2 + $0xe0] sm:$0xff] %vm169, 0.0
        %200 = vst.msk [vmem:[#allocation2 + $0xe8] sm:$0x3] %vm172, 0.0
        %201 = vst.msk [vmem:[#allocation2 + $0xf0] sm:$0xff] %vm169, 0.0
        %202 = vst.msk [vmem:[#allocation2 + $0xf8] sm:$0xff] %vm169, 0.0
        %203 = vst.msk [vmem:[#allocation2 + $0x100] sm:$0x3] %vm172, 0.0
        %204 = vst.msk [vmem:[#allocation2 + $0x108] sm:$0xff] %vm169, 0.0
        %205 = vst.msk [vmem:[#allocation2 + $0x110] sm:$0xff] %vm169, 0.0
        %206 = vst.msk [vmem:[#allocation2 + $0x118] sm:$0x3] %vm172, 0.0
        %207 = vst.msk [vmem:[#allocation2 + $0x120] sm:$0xff] %vm169, 0.0
        %208 = vst.msk [vmem:[#allocation2 + $0x128] sm:$0xff] %vm169, 0.0
        %209 = vst.msk [vmem:[#allocation2 + $0x130] sm:$0x3] %vm172, 0.0
        %210 = vst.msk [vmem:[#allocation2 + $0x138] sm:$0xff] %vm169, 0.0
        %211 = vst.msk [vmem:[#allocation2 + $0x140] sm:$0xff] %vm169, 0.0
        %212 = vst.msk [vmem:[#allocation2 + $0x148] sm:$0x3] %vm172, 0.0
        %213 = vst.msk [vmem:[#allocation2 + $0x150] sm:$0xff] %vm169, 0.0
        %214 = vst.msk [vmem:[#allocation2 + $0x158] sm:$0xff] %vm169, 0.0
        %215 = vst.msk [vmem:[#allocation2 + $0x160] sm:$0x3] %vm172, 0.0
        %216 = vst.msk [vmem:[#allocation2 + $0x168] sm:$0xff] %vm169, 0.0
        %217 = vst.msk [vmem:[#allocation2 + $0x170] sm:$0xff] %vm169, 0.0
        %218 = vst.msk [vmem:[#allocation2 + $0x178] sm:$0x3] %vm172, 0.0
        %219 = vst.msk [vmem:[#allocation2 + $0x180] sm:$0xff] %vm169, 0.0
        %220 = vst.msk [vmem:[#allocation2 + $0x188] sm:$0xff] %vm169, 0.0
        %221 = vst.msk [vmem:[#allocation2 + $0x190] sm:$0x3] %vm172, 0.0
        %222 = vst.msk [vmem:[#allocation2 + $0x198] sm:$0xff] %vm169, 0.0
        %223 = vst.msk [vmem:[#allocation2 + $0x1a0] sm:$0xff] %vm169, 0.0
        %224 = vst.msk [vmem:[#allocation2 + $0x1a8] sm:$0x3] %vm172, 0.0
        %v225 = vld [vmem:[%s168] sm:$0xff]
        %v226 = vld [vmem:[%s168 + $0x8] sm:$0xff]
        %v227 = vld [vmem:[%s168 + $0x10] sm:$0xff]
        %v228 = vld [vmem:[%s168 + $0x18] sm:$0xff]
        %v229 = vld [vmem:[%s168 + $0x20] sm:$0xff]
        %v230 = vld [vmem:[%s168 + $0x28] sm:$0xff]
        %v231 = vld [vmem:[%s168 + $0x30] sm:$0xff]
        %v232 = vld [vmem:[%s168 + $0x38] sm:$0xff]
        %v233 = vld [vmem:[%s168 + $0x40] sm:$0xff]
        %v234 = vld [vmem:[%s168 + $0x48] sm:$0xff]
        %v235 = vld [vmem:[%s168 + $0x50] sm:$0xff]
        %v236 = vld [vmem:[%s168 + $0x58] sm:$0xff]
        %v237 = vld [vmem:[%s168 + $0x60] sm:$0xff]
        %v238 = vld [vmem:[%s168 + $0x68] sm:$0xff]
        %v239 = vld [vmem:[%s168 + $0x70] sm:$0xff]
        %v240 = vld [vmem:[%s168 + $0x78] sm:$0xff]
        %v241 = vld [vmem:[%s168 + $0x80] sm:$0xff]
        %v242 = vld [vmem:[%s168 + $0x88] sm:$0xff]
        %v243 = vld [vmem:[%s168 + $0x90] sm:$0xff]
        %v244 = vld [vmem:[%s168 + $0x98] sm:$0xff]
        %v245 = vld [vmem:[%s168 + $0xa0] sm:$0xff]
        %v246 = vld [vmem:[%s168 + $0xa8] sm:$0xff]
        %v247 = vld [vmem:[%s168 + $0xb0] sm:$0xff]
        %v248 = vld [vmem:[%s168 + $0xb8] sm:$0xff]
        %v249 = vld [vmem:[%s168 + $0xc0] sm:$0xff]
        %v250 = vld [vmem:[%s168 + $0xc8] sm:$0xff]
        %v251 = vld [vmem:[%s168 + $0xd0] sm:$0xff]
        %v252 = vld [vmem:[%s168 + $0xd8] sm:$0xff]
        %v253 = vld [vmem:[%s168 + $0xe0] sm:$0xff]
        %v254 = vld [vmem:[%s168 + $0xe8] sm:$0xff]
        %v255 = vld [vmem:[%s168 + $0xf0] sm:$0xff]
        %v256 = vld [vmem:[%s168 + $0xf8] sm:$0xff]
        %s257 = scalar_lea.vmem [#allocation2], 24
        %258 = vst.msk [vmem:[%s257 + $0x1] sm:$0xff] %vm169, %v225
        %259 = vst.msk [vmem:[%s257 + $0x9] sm:$0xff] %vm169, %v226
        %260 = vst.msk [vmem:[%s257 + $0x19] sm:$0xff] %vm169, %v227
        %261 = vst.msk [vmem:[%s257 + $0x21] sm:$0xff] %vm169, %v228
        %262 = vst.msk [vmem:[%s257 + $0x31] sm:$0xff] %vm169, %v229
        %263 = vst.msk [vmem:[%s257 + $0x39] sm:$0xff] %vm169, %v230
        %264 = vst.msk [vmem:[%s257 + $0x49] sm:$0xff] %vm169, %v231
        %265 = vst.msk [vmem:[%s257 + $0x51] sm:$0xff] %vm169, %v232
        %266 = vst.msk [vmem:[%s257 + $0x61] sm:$0xff] %vm169, %v233
        %267 = vst.msk [vmem:[%s257 + $0x69] sm:$0xff] %vm169, %v234
        %268 = vst.msk [vmem:[%s257 + $0x79] sm:$0xff] %vm169, %v235
        %269 = vst.msk [vmem:[%s257 + $0x81] sm:$0xff] %vm169, %v236
        %270 = vst.msk [vmem:[%s257 + $0x91] sm:$0xff] %vm169, %v237
        %271 = vst.msk [vmem:[%s257 + $0x99] sm:$0xff] %vm169, %v238
        %272 = vst.msk [vmem:[%s257 + $0xa9] sm:$0xff] %vm169, %v239
        %273 = vst.msk [vmem:[%s257 + $0xb1] sm:$0xff] %vm169, %v240
        %274 = vst.msk [vmem:[%s257 + $0xc1] sm:$0xff] %vm169, %v241
        %275 = vst.msk [vmem:[%s257 + $0xc9] sm:$0xff] %vm169, %v242
        %276 = vst.msk [vmem:[%s257 + $0xd9] sm:$0xff] %vm169, %v243
        %277 = vst.msk [vmem:[%s257 + $0xe1] sm:$0xff] %vm169, %v244
        %278 = vst.msk [vmem:[%s257 + $0xf1] sm:$0xff] %vm169, %v245
        %279 = vst.msk [vmem:[%s257 + $0xf9] sm:$0xff] %vm169, %v246
        %280 = vst.msk [vmem:[%s257 + $0x109] sm:$0xff] %vm169, %v247
        %281 = vst.msk [vmem:[%s257 + $0x111] sm:$0xff] %vm169, %v248
        %282 = vst.msk [vmem:[%s257 + $0x121] sm:$0xff] %vm169, %v249
        %283 = vst.msk [vmem:[%s257 + $0x129] sm:$0xff] %vm169, %v250
        %284 = vst.msk [vmem:[%s257 + $0x139] sm:$0xff] %vm169, %v251
        %285 = vst.msk [vmem:[%s257 + $0x141] sm:$0xff] %vm169, %v252
        %286 = vst.msk [vmem:[%s257 + $0x151] sm:$0xff] %vm169, %v253
        %287 = vst.msk [vmem:[%s257 + $0x159] sm:$0xff] %vm169, %v254
        %288 = vst.msk [vmem:[%s257 + $0x169] sm:$0xff] %vm169, %v255
        %289 = vst.msk [vmem:[%s257 + $0x171] sm:$0xff] %vm169, %v256
        %v290 = vld [vmem:[#allocation2] sm:$0xff]
        %v291 = vld [vmem:[#allocation2 + $0x8] sm:$0xff]
        %v292 = vld [vmem:[#allocation2 + $0x18] sm:$0xff]
        %v293 = vld [vmem:[#allocation2 + $0x20] sm:$0xff]
        %v294 = vld [vmem:[#allocation2 + $0x30] sm:$0xff]
        %v295 = vld [vmem:[#allocation2 + $0x38] sm:$0xff]
        %v296 = vld [vmem:[#allocation2 + $0x48] sm:$0xff]
        %v297 = vld [vmem:[#allocation2 + $0x50] sm:$0xff]
        %v298 = vld [vmem:[#allocation2 + $0x60] sm:$0xff]
        %v299 = vld [vmem:[#allocation2 + $0x68] sm:$0xff]
        %v300 = vld [vmem:[#allocation2 + $0x78] sm:$0xff]
        %v301 = vld [vmem:[#allocation2 + $0x80] sm:$0xff]
        %v302 = vld [vmem:[#allocation2 + $0x90] sm:$0xff]
        %v303 = vld [vmem:[#allocation2 + $0x98] sm:$0xff]
        %v304 = vld [vmem:[#allocation2 + $0xa8] sm:$0xff]
        %v305 = vld [vmem:[#allocation2 + $0xb0] sm:$0xff]
        %v306 = vld [vmem:[#allocation2 + $0xc0] sm:$0xff]
        %v307 = vld [vmem:[#allocation2 + $0xc8] sm:$0xff]
        %v308 = vld [vmem:[#allocation2 + $0xd8] sm:$0xff]
        %v309 = vld [vmem:[#allocation2 + $0xe0] sm:$0xff]
        %v310 = vld [vmem:[#allocation2 + $0xf0] sm:$0xff]
        %v311 = vld [vmem:[#allocation2 + $0xf8] sm:$0xff]
        %v312 = vld [vmem:[#allocation2 + $0x108] sm:$0xff]
        %v313 = vld [vmem:[#allocation2 + $0x110] sm:$0xff]
        %v314 = vld [vmem:[#allocation2 + $0x120] sm:$0xff]
        %v315 = vld [vmem:[#allocation2 + $0x128] sm:$0xff]
        %v316 = vld [vmem:[#allocation2 + $0x138] sm:$0xff]
        %v317 = vld [vmem:[#allocation2 + $0x140] sm:$0xff]
        %v318 = vld [vmem:[#allocation2 + $0x150] sm:$0xff]
        %v319 = vld [vmem:[#allocation2 + $0x158] sm:$0xff]
        %v320 = vld [vmem:[#allocation2 + $0x168] sm:$0xff]
        %v321 = vld [vmem:[#allocation2 + $0x170] sm:$0xff]
        %322 = vst.msk [vmem:[#allocation3] sm:$0xff] %vm169, %v290
        %323 = vst.msk [vmem:[#allocation3 + $0x8] sm:$0xff] %vm169, %v291
        %324 = vst.msk [vmem:[#allocation3 + $0x10] sm:$0xff] %vm169, %v292
        %325 = vst.msk [vmem:[#allocation3 + $0x18] sm:$0xff] %vm169, %v293
        %326 = vst.msk [vmem:[#allocation3 + $0x20] sm:$0xff] %vm169, %v294
        %327 = vst.msk [vmem:[#allocation3 + $0x28] sm:$0xff] %vm169, %v295
        %328 = vst.msk [vmem:[#allocation3 + $0x30] sm:$0xff] %vm169, %v296
        %329 = vst.msk [vmem:[#allocation3 + $0x38] sm:$0xff] %vm169, %v297
        %330 = vst.msk [vmem:[#allocation3 + $0x40] sm:$0xff] %vm169, %v298
        %331 = vst.msk [vmem:[#allocation3 + $0x48] sm:$0xff] %vm169, %v299
        %332 = vst.msk [vmem:[#allocation3 + $0x50] sm:$0xff] %vm169, %v300
        %333 = vst.msk [vmem:[#allocation3 + $0x58] sm:$0xff] %vm169, %v301
        %334 = vst.msk [vmem:[#allocation3 + $0x60] sm:$0xff] %vm169, %v302
        %335 = vst.msk [vmem:[#allocation3 + $0x68] sm:$0xff] %vm169, %v303
        %336 = vst.msk [vmem:[#allocation3 + $0x70] sm:$0xff] %vm169, %v304
        %337 = vst.msk [vmem:[#allocation3 + $0x78] sm:$0xff] %vm169, %v305
        %338 = vst.msk [vmem:[#allocation3 + $0x80] sm:$0xff] %vm169, %v306
        %339 = vst.msk [vmem:[#allocation3 + $0x88] sm:$0xff] %vm169, %v307
        %340 = vst.msk [vmem:[#allocation3 + $0x90] sm:$0xff] %vm169, %v308
        %341 = vst.msk [vmem:[#allocation3 + $0x98] sm:$0xff] %vm169, %v309
        %342 = vst.msk [vmem:[#allocation3 + $0xa0] sm:$0xff] %vm169, %v310
        %343 = vst.msk [vmem:[#allocation3 + $0xa8] sm:$0xff] %vm169, %v311
        %344 = vst.msk [vmem:[#allocation3 + $0xb0] sm:$0xff] %vm169, %v312
        %345 = vst.msk [vmem:[#allocation3 + $0xb8] sm:$0xff] %vm169, %v313
        %346 = vst.msk [vmem:[#allocation3 + $0xc0] sm:$0xff] %vm169, %v314
        %347 = vst.msk [vmem:[#allocation3 + $0xc8] sm:$0xff] %vm169, %v315
        %348 = vst.msk [vmem:[#allocation3 + $0xd0] sm:$0xff] %vm169, %v316
        %349 = vst.msk [vmem:[#allocation3 + $0xd8] sm:$0xff] %vm169, %v317
        %350 = vst.msk [vmem:[#allocation3 + $0xe0] sm:$0xff] %vm169, %v318
        %351 = vst.msk [vmem:[#allocation3 + $0xe8] sm:$0xff] %vm169, %v319
        %352 = vst.msk [vmem:[#allocation3 + $0xf0] sm:$0xff] %vm169, %v320
        %353 = vst.msk [vmem:[#allocation3 + $0xf8] sm:$0xff] %vm169, %v321
        %v354 = vld [vmem:[#allocation2 + $0x1] sm:$0xff]
        %v355 = vld [vmem:[#allocation2 + $0x9] sm:$0xff]
        %v356 = vld [vmem:[#allocation2 + $0x19] sm:$0xff]
        %v357 = vld [vmem:[#allocation2 + $0x21] sm:$0xff]
        %v358 = vld [vmem:[#allocation2 + $0x31] sm:$0xff]
        %v359 = vld [vmem:[#allocation2 + $0x39] sm:$0xff]
        %v360 = vld [vmem:[#allocation2 + $0x49] sm:$0xff]
        %v361 = vld [vmem:[#allocation2 + $0x51] sm:$0xff]
        %v362 = vld [vmem:[#allocation2 + $0x61] sm:$0xff]
        %v363 = vld [vmem:[#allocation2 + $0x69] sm:$0xff]
        %v364 = vld [vmem:[#allocation2 + $0x79] sm:$0xff]
        %v365 = vld [vmem:[#allocation2 + $0x81] sm:$0xff]
        %v366 = vld [vmem:[#allocation2 + $0x91] sm:$0xff]
        %v367 = vld [vmem:[#allocation2 + $0x99] sm:$0xff]
        %v368 = vld [vmem:[#allocation2 + $0xa9] sm:$0xff]
        %v369 = vld [vmem:[#allocation2 + $0xb1] sm:$0xff]
        %v370 = vld [vmem:[#allocation2 + $0xc1] sm:$0xff]
        %v371 = vld [vmem:[#allocation2 + $0xc9] sm:$0xff]
        %v372 = vld [vmem:[#allocation2 + $0xd9] sm:$0xff]
        %v373 = vld [vmem:[#allocation2 + $0xe1] sm:$0xff]
        %v374 = vld [vmem:[#allocation2 + $0xf1] sm:$0xff]
        %v375 = vld [vmem:[#allocation2 + $0xf9] sm:$0xff]
        %v376 = vld [vmem:[#allocation2 + $0x109] sm:$0xff]
        %v377 = vld [vmem:[#allocation2 + $0x111] sm:$0xff]
        %v378 = vld [vmem:[#allocation2 + $0x121] sm:$0xff]
        %v379 = vld [vmem:[#allocation2 + $0x129] sm:$0xff]
        %v380 = vld [vmem:[#allocation2 + $0x139] sm:$0xff]
        %v381 = vld [vmem:[#allocation2 + $0x141] sm:$0xff]
        %v382 = vld [vmem:[#allocation2 + $0x151] sm:$0xff]
        %v383 = vld [vmem:[#allocation2 + $0x159] sm:$0xff]
        %v384 = vld [vmem:[#allocation2 + $0x169] sm:$0xff]
        %v385 = vld [vmem:[#allocation2 + $0x171] sm:$0xff]
        %418 = vrot.lane.b32.xlu0 %v354, 4
        %v419 = vpop.permute.xlu0 %418
        %420 = vrot.lane.b32.xlu0 %v355, 4
        %v421 = vpop.permute.xlu0 %420
        %422 = vrot.lane.b32.xlu0 %v356, 4
        %v423 = vpop.permute.xlu0 %422
        %424 = vrot.lane.b32.xlu0 %v357, 4
        %v425 = vpop.permute.xlu0 %424
        %426 = vrot.lane.b32.xlu0 %v358, 4
        %v427 = vpop.permute.xlu0 %426
        %428 = vrot.lane.b32.xlu0 %v359, 4
        %v429 = vpop.permute.xlu0 %428
        %430 = vrot.lane.b32.xlu0 %v360, 4
        %v431 = vpop.permute.xlu0 %430
        %432 = vrot.lane.b32.xlu0 %v361, 4
        %v433 = vpop.permute.xlu0 %432
        %434 = vrot.lane.b32.xlu0 %v362, 4
        %v435 = vpop.permute.xlu0 %434
        %436 = vrot.lane.b32.xlu0 %v363, 4
        %v437 = vpop.permute.xlu0 %436
        %438 = vrot.lane.b32.xlu0 %v364, 4
        %v439 = vpop.permute.xlu0 %438
        %440 = vrot.lane.b32.xlu0 %v365, 4
        %v441 = vpop.permute.xlu0 %440
        %442 = vrot.lane.b32.xlu0 %v366, 4
        %v443 = vpop.permute.xlu0 %442
        %444 = vrot.lane.b32.xlu0 %v367, 4
        %v445 = vpop.permute.xlu0 %444
        %446 = vrot.lane.b32.xlu0 %v368, 4
        %v447 = vpop.permute.xlu0 %446
        %448 = vrot.lane.b32.xlu0 %v369, 4
        %v449 = vpop.permute.xlu0 %448
        %450 = vrot.lane.b32.xlu0 %v370, 4
        %v451 = vpop.permute.xlu0 %450
        %452 = vrot.lane.b32.xlu0 %v371, 4
        %v453 = vpop.permute.xlu0 %452
        %454 = vrot.lane.b32.xlu0 %v372, 4
        %v455 = vpop.permute.xlu0 %454
        %456 = vrot.lane.b32.xlu0 %v373, 4
        %v457 = vpop.permute.xlu0 %456
        %458 = vrot.lane.b32.xlu0 %v374, 4
        %v459 = vpop.permute.xlu0 %458
        %460 = vrot.lane.b32.xlu0 %v375, 4
        %v461 = vpop.permute.xlu0 %460
        %462 = vrot.lane.b32.xlu0 %v376, 4
        %v463 = vpop.permute.xlu0 %462
        %464 = vrot.lane.b32.xlu0 %v377, 4
        %v465 = vpop.permute.xlu0 %464
        %466 = vrot.lane.b32.xlu0 %v378, 4
        %v467 = vpop.permute.xlu0 %466
        %468 = vrot.lane.b32.xlu0 %v379, 4
        %v469 = vpop.permute.xlu0 %468
        %470 = vrot.lane.b32.xlu0 %v380, 4
        %v471 = vpop.permute.xlu0 %470
        %472 = vrot.lane.b32.xlu0 %v381, 4
        %v473 = vpop.permute.xlu0 %472
        %474 = vrot.lane.b32.xlu0 %v382, 4
        %v475 = vpop.permute.xlu0 %474
        %476 = vrot.lane.b32.xlu0 %v383, 4
        %v477 = vpop.permute.xlu0 %476
        %478 = vrot.lane.b32.xlu0 %v384, 4
        %v479 = vpop.permute.xlu0 %478
        %480 = vrot.lane.b32.xlu0 %v385, 4
        %v481 = vpop.permute.xlu0 %480
        %vm514 = vcmask 64544
        %515 = vst.msk [vmem:[#allocation3] sm:$0xff] %vm514, %v419
        %516 = vst.msk [vmem:[#allocation3 + $0x8] sm:$0xff] %vm514, %v421
        %517 = vst.msk [vmem:[#allocation3 + $0x10] sm:$0xff] %vm514, %v423
        %518 = vst.msk [vmem:[#allocation3 + $0x18] sm:$0xff] %vm514, %v425
        %519 = vst.msk [vmem:[#allocation3 + $0x20] sm:$0xff] %vm514, %v427
        %520 = vst.msk [vmem:[#allocation3 + $0x28] sm:$0xff] %vm514, %v429
        %521 = vst.msk [vmem:[#allocation3 + $0x30] sm:$0xff] %vm514, %v431
        %522 = vst.msk [vmem:[#allocation3 + $0x38] sm:$0xff] %vm514, %v433
        %523 = vst.msk [vmem:[#allocation3 + $0x40] sm:$0xff] %vm514, %v435
        %524 = vst.msk [vmem:[#allocation3 + $0x48] sm:$0xff] %vm514, %v437
        %525 = vst.msk [vmem:[#allocation3 + $0x50] sm:$0xff] %vm514, %v439
        %526 = vst.msk [vmem:[#allocation3 + $0x58] sm:$0xff] %vm514, %v441
        %527 = vst.msk [vmem:[#allocation3 + $0x60] sm:$0xff] %vm514, %v443
        %528 = vst.msk [vmem:[#allocation3 + $0x68] sm:$0xff] %vm514, %v445
        %529 = vst.msk [vmem:[#allocation3 + $0x70] sm:$0xff] %vm514, %v447
        %530 = vst.msk [vmem:[#allocation3 + $0x78] sm:$0xff] %vm514, %v449
        %531 = vst.msk [vmem:[#allocation3 + $0x80] sm:$0xff] %vm514, %v451
        %532 = vst.msk [vmem:[#allocation3 + $0x88] sm:$0xff] %vm514, %v453
        %533 = vst.msk [vmem:[#allocation3 + $0x90] sm:$0xff] %vm514, %v455
        %534 = vst.msk [vmem:[#allocation3 + $0x98] sm:$0xff] %vm514, %v457
        %535 = vst.msk [vmem:[#allocation3 + $0xa0] sm:$0xff] %vm514, %v459
        %536 = vst.msk [vmem:[#allocation3 + $0xa8] sm:$0xff] %vm514, %v461
        %537 = vst.msk [vmem:[#allocation3 + $0xb0] sm:$0xff] %vm514, %v463
        %538 = vst.msk [vmem:[#allocation3 + $0xb8] sm:$0xff] %vm514, %v465
        %539 = vst.msk [vmem:[#allocation3 + $0xc0] sm:$0xff] %vm514, %v467
        %540 = vst.msk [vmem:[#allocation3 + $0xc8] sm:$0xff] %vm514, %v469
        %541 = vst.msk [vmem:[#allocation3 + $0xd0] sm:$0xff] %vm514, %v471
        %542 = vst.msk [vmem:[#allocation3 + $0xd8] sm:$0xff] %vm514, %v473
        %543 = vst.msk [vmem:[#allocation3 + $0xe0] sm:$0xff] %vm514, %v475
        %544 = vst.msk [vmem:[#allocation3 + $0xe8] sm:$0xff] %vm514, %v477
        %545 = vst.msk [vmem:[#allocation3 + $0xf0] sm:$0xff] %vm514, %v479
        %546 = vst.msk [vmem:[#allocation3 + $0xf8] sm:$0xff] %vm514, %v481
        %v547 = vld [vmem:[#allocation2 + $0x2] sm:$0xff]
        %v548 = vld [vmem:[#allocation2 + $0xa] sm:$0xff]
        %v549 = vld [vmem:[#allocation2 + $0x1a] sm:$0xff]
        %v550 = vld [vmem:[#allocation2 + $0x22] sm:$0xff]
        %v551 = vld [vmem:[#allocation2 + $0x32] sm:$0xff]
        %v552 = vld [vmem:[#allocation2 + $0x3a] sm:$0xff]
        %v553 = vld [vmem:[#allocation2 + $0x4a] sm:$0xff]
        %v554 = vld [vmem:[#allocation2 + $0x52] sm:$0xff]
        %v555 = vld [vmem:[#allocation2 + $0x62] sm:$0xff]
        %v556 = vld [vmem:[#allocation2 + $0x6a] sm:$0xff]
        %v557 = vld [vmem:[#allocation2 + $0x7a] sm:$0xff]
        %v558 = vld [vmem:[#allocation2 + $0x82] sm:$0xff]
        %v559 = vld [vmem:[#allocation2 + $0x92] sm:$0xff]
        %v560 = vld [vmem:[#allocation2 + $0x9a] sm:$0xff]
        %v561 = vld [vmem:[#allocation2 + $0xaa] sm:$0xff]
        %v562 = vld [vmem:[#allocation2 + $0xb2] sm:$0xff]
        %v563 = vld [vmem:[#allocation2 + $0xc2] sm:$0xff]
        %v564 = vld [vmem:[#allocation2 + $0xca] sm:$0xff]
        %v565 = vld [vmem:[#allocation2 + $0xda] sm:$0xff]
        %v566 = vld [vmem:[#allocation2 + $0xe2] sm:$0xff]
        %v567 = vld [vmem:[#allocation2 + $0xf2] sm:$0xff]
        %v568 = vld [vmem:[#allocation2 + $0xfa] sm:$0xff]
        %v569 = vld [vmem:[#allocation2 + $0x10a] sm:$0xff]
        %v570 = vld [vmem:[#allocation2 + $0x112] sm:$0xff]
        %v571 = vld [vmem:[#allocation2 + $0x122] sm:$0xff]
        %v572 = vld [vmem:[#allocation2 + $0x12a] sm:$0xff]
        %v573 = vld [vmem:[#allocation2 + $0x13a] sm:$0xff]
        %v574 = vld [vmem:[#allocation2 + $0x142] sm:$0xff]
        %v575 = vld [vmem:[#allocation2 + $0x152] sm:$0xff]
        %v576 = vld [vmem:[#allocation2 + $0x15a] sm:$0xff]
        %v577 = vld [vmem:[#allocation2 + $0x16a] sm:$0xff]
        %v578 = vld [vmem:[#allocation2 + $0x172] sm:$0xff]
        %611 = vrot.lane.b32.xlu0 %v547, 8
        %v612 = vpop.permute.xlu0 %611
        %613 = vrot.lane.b32.xlu0 %v548, 8
        %v614 = vpop.permute.xlu0 %613
        %615 = vrot.lane.b32.xlu0 %v549, 8
        %v616 = vpop.permute.xlu0 %615
        %617 = vrot.lane.b32.xlu0 %v550, 8
        %v618 = vpop.permute.xlu0 %617
        %619 = vrot.lane.b32.xlu0 %v551, 8
        %v620 = vpop.permute.xlu0 %619
        %621 = vrot.lane.b32.xlu0 %v552, 8
        %v622 = vpop.permute.xlu0 %621
        %623 = vrot.lane.b32.xlu0 %v553, 8
        %v624 = vpop.permute.xlu0 %623
        %625 = vrot.lane.b32.xlu0 %v554, 8
        %v626 = vpop.permute.xlu0 %625
        %627 = vrot.lane.b32.xlu0 %v555, 8
        %v628 = vpop.permute.xlu0 %627
        %629 = vrot.lane.b32.xlu0 %v556, 8
        %v630 = vpop.permute.xlu0 %629
        %631 = vrot.lane.b32.xlu0 %v557, 8
        %v632 = vpop.permute.xlu0 %631
        %633 = vrot.lane.b32.xlu0 %v558, 8
        %v634 = vpop.permute.xlu0 %633
        %635 = vrot.lane.b32.xlu0 %v559, 8
        %v636 = vpop.permute.xlu0 %635
        %637 = vrot.lane.b32.xlu0 %v560, 8
        %v638 = vpop.permute.xlu0 %637
        %639 = vrot.lane.b32.xlu0 %v561, 8
        %v640 = vpop.permute.xlu0 %639
        %641 = vrot.lane.b32.xlu0 %v562, 8
        %v642 = vpop.permute.xlu0 %641
        %643 = vrot.lane.b32.xlu0 %v563, 8
        %v644 = vpop.permute.xlu0 %643
        %645 = vrot.lane.b32.xlu0 %v564, 8
        %v646 = vpop.permute.xlu0 %645
        %647 = vrot.lane.b32.xlu0 %v565, 8
        %v648 = vpop.permute.xlu0 %647
        %649 = vrot.lane.b32.xlu0 %v566, 8
        %v650 = vpop.permute.xlu0 %649
        %651 = vrot.lane.b32.xlu0 %v567, 8
        %v652 = vpop.permute.xlu0 %651
        %653 = vrot.lane.b32.xlu0 %v568, 8
        %v654 = vpop.permute.xlu0 %653
        %655 = vrot.lane.b32.xlu0 %v569, 8
        %v656 = vpop.permute.xlu0 %655
        %657 = vrot.lane.b32.xlu0 %v570, 8
        %v658 = vpop.permute.xlu0 %657
        %659 = vrot.lane.b32.xlu0 %v571, 8
        %v660 = vpop.permute.xlu0 %659
        %661 = vrot.lane.b32.xlu0 %v572, 8
        %v662 = vpop.permute.xlu0 %661
        %663 = vrot.lane.b32.xlu0 %v573, 8
        %v664 = vpop.permute.xlu0 %663
        %665 = vrot.lane.b32.xlu0 %v574, 8
        %v666 = vpop.permute.xlu0 %665
        %667 = vrot.lane.b32.xlu0 %v575, 8
        %v668 = vpop.permute.xlu0 %667
        %669 = vrot.lane.b32.xlu0 %v576, 8
        %v670 = vpop.permute.xlu0 %669
        %671 = vrot.lane.b32.xlu0 %v577, 8
        %v672 = vpop.permute.xlu0 %671
        %673 = vrot.lane.b32.xlu0 %v578, 8
        %v674 = vpop.permute.xlu0 %673
        %vm707 = vcmask 97344
        %708 = vst.msk [vmem:[#allocation3] sm:$0xff] %vm707, %v612
        %709 = vst.msk [vmem:[#allocation3 + $0x8] sm:$0xff] %vm707, %v614
        %710 = vst.msk [vmem:[#allocation3 + $0x10] sm:$0xff] %vm707, %v616
        %711 = vst.msk [vmem:[#allocation3 + $0x18] sm:$0xff] %vm707, %v618
        %712 = vst.msk [vmem:[#allocation3 + $0x20] sm:$0xff] %vm707, %v620
        %713 = vst.msk [vmem:[#allocation3 + $0x28] sm:$0xff] %vm707, %v622
        %714 = vst.msk [vmem:[#allocation3 + $0x30] sm:$0xff] %vm707, %v624
        %715 = vst.msk [vmem:[#allocation3 + $0x38] sm:$0xff] %vm707, %v626
        %716 = vst.msk [vmem:[#allocation3 + $0x40] sm:$0xff] %vm707, %v628
        %717 = vst.msk [vmem:[#allocation3 + $0x48] sm:$0xff] %vm707, %v630
        %718 = vst.msk [vmem:[#allocation3 + $0x50] sm:$0xff] %vm707, %v632
        %719 = vst.msk [vmem:[#allocation3 + $0x58] sm:$0xff] %vm707, %v634
        %720 = vst.msk [vmem:[#allocation3 + $0x60] sm:$0xff] %vm707, %v636
        %721 = vst.msk [vmem:[#allocation3 + $0x68] sm:$0xff] %vm707, %v638
        %722 = vst.msk [vmem:[#allocation3 + $0x70] sm:$0xff] %vm707, %v640
        %723 = vst.msk [vmem:[#allocation3 + $0x78] sm:$0xff] %vm707, %v642
        %724 = vst.msk [vmem:[#allocation3 + $0x80] sm:$0xff] %vm707, %v644
        %725 = vst.msk [vmem:[#allocation3 + $0x88] sm:$0xff] %vm707, %v646
        %726 = vst.msk [vmem:[#allocation3 + $0x90] sm:$0xff] %vm707, %v648
        %727 = vst.msk [vmem:[#allocation3 + $0x98] sm:$0xff] %vm707, %v650
        %728 = vst.msk [vmem:[#allocation3 + $0xa0] sm:$0xff] %vm707, %v652
        %729 = vst.msk [vmem:[#allocation3 + $0xa8] sm:$0xff] %vm707, %v654
        %730 = vst.msk [vmem:[#allocation3 + $0xb0] sm:$0xff] %vm707, %v656
        %731 = vst.msk [vmem:[#allocation3 + $0xb8] sm:$0xff] %vm707, %v658
        %732 = vst.msk [vmem:[#allocation3 + $0xc0] sm:$0xff] %vm707, %v660
        %733 = vst.msk [vmem:[#allocation3 + $0xc8] sm:$0xff] %vm707, %v662
        %734 = vst.msk [vmem:[#allocation3 + $0xd0] sm:$0xff] %vm707, %v664
        %735 = vst.msk [vmem:[#allocation3 + $0xd8] sm:$0xff] %vm707, %v666
        %736 = vst.msk [vmem:[#allocation3 + $0xe0] sm:$0xff] %vm707, %v668
        %737 = vst.msk [vmem:[#allocation3 + $0xe8] sm:$0xff] %vm707, %v670
        %738 = vst.msk [vmem:[#allocation3 + $0xf0] sm:$0xff] %vm707, %v672
        %739 = vst.msk [vmem:[#allocation3 + $0xf8] sm:$0xff] %vm707, %v674
        %v740 = vld [vmem:[%s257] sm:$0xff]
        %v741 = vld [vmem:[%s257 + $0x8] sm:$0xff]
        %v742 = vld [vmem:[%s257 + $0x18] sm:$0xff]
        %v743 = vld [vmem:[%s257 + $0x20] sm:$0xff]
        %v744 = vld [vmem:[%s257 + $0x30] sm:$0xff]
        %v745 = vld [vmem:[%s257 + $0x38] sm:$0xff]
        %v746 = vld [vmem:[%s257 + $0x48] sm:$0xff]
        %v747 = vld [vmem:[%s257 + $0x50] sm:$0xff]
        %v748 = vld [vmem:[%s257 + $0x60] sm:$0xff]
        %v749 = vld [vmem:[%s257 + $0x68] sm:$0xff]
        %v750 = vld [vmem:[%s257 + $0x78] sm:$0xff]
        %v751 = vld [vmem:[%s257 + $0x80] sm:$0xff]
        %v752 = vld [vmem:[%s257 + $0x90] sm:$0xff]
        %v753 = vld [vmem:[%s257 + $0x98] sm:$0xff]
        %v754 = vld [vmem:[%s257 + $0xa8] sm:$0xff]
        %v755 = vld [vmem:[%s257 + $0xb0] sm:$0xff]
        %v756 = vld [vmem:[%s257 + $0xc0] sm:$0xff]
        %v757 = vld [vmem:[%s257 + $0xc8] sm:$0xff]
        %v758 = vld [vmem:[%s257 + $0xd8] sm:$0xff]
        %v759 = vld [vmem:[%s257 + $0xe0] sm:$0xff]
        %v760 = vld [vmem:[%s257 + $0xf0] sm:$0xff]
        %v761 = vld [vmem:[%s257 + $0xf8] sm:$0xff]
        %v762 = vld [vmem:[%s257 + $0x108] sm:$0xff]
        %v763 = vld [vmem:[%s257 + $0x110] sm:$0xff]
        %v764 = vld [vmem:[%s257 + $0x120] sm:$0xff]
        %v765 = vld [vmem:[%s257 + $0x128] sm:$0xff]
        %v766 = vld [vmem:[%s257 + $0x138] sm:$0xff]
        %v767 = vld [vmem:[%s257 + $0x140] sm:$0xff]
        %v768 = vld [vmem:[%s257 + $0x150] sm:$0xff]
        %v769 = vld [vmem:[%s257 + $0x158] sm:$0xff]
        %v770 = vld [vmem:[%s257 + $0x168] sm:$0xff]
        %v771 = vld [vmem:[%s257 + $0x170] sm:$0xff]
        %804 = vrot.lane.b32.xlu0 %v740, 12
        %v805 = vpop.permute.xlu0 %804
        %806 = vrot.lane.b32.xlu0 %v741, 12
        %v807 = vpop.permute.xlu0 %806
        %808 = vrot.lane.b32.xlu0 %v742, 12
        %v809 = vpop.permute.xlu0 %808
        %810 = vrot.lane.b32.xlu0 %v743, 12
        %v811 = vpop.permute.xlu0 %810
        %812 = vrot.lane.b32.xlu0 %v744, 12
        %v813 = vpop.permute.xlu0 %812
        %814 = vrot.lane.b32.xlu0 %v745, 12
        %v815 = vpop.permute.xlu0 %814
        %816 = vrot.lane.b32.xlu0 %v746, 12
        %v817 = vpop.permute.xlu0 %816
        %818 = vrot.lane.b32.xlu0 %v747, 12
        %v819 = vpop.permute.xlu0 %818
        %820 = vrot.lane.b32.xlu0 %v748, 12
        %v821 = vpop.permute.xlu0 %820
        %822 = vrot.lane.b32.xlu0 %v749, 12
        %v823 = vpop.permute.xlu0 %822
        %824 = vrot.lane.b32.xlu0 %v750, 12
        %v825 = vpop.permute.xlu0 %824
        %826 = vrot.lane.b32.xlu0 %v751, 12
        %v827 = vpop.permute.xlu0 %826
        %828 = vrot.lane.b32.xlu0 %v752, 12
        %v829 = vpop.permute.xlu0 %828
        %830 = vrot.lane.b32.xlu0 %v753, 12
        %v831 = vpop.permute.xlu0 %830
        %832 = vrot.lane.b32.xlu0 %v754, 12
        %v833 = vpop.permute.xlu0 %832
        %834 = vrot.lane.b32.xlu0 %v755, 12
        %v835 = vpop.permute.xlu0 %834
        %836 = vrot.lane.b32.xlu0 %v756, 12
        %v837 = vpop.permute.xlu0 %836
        %838 = vrot.lane.b32.xlu0 %v757, 12
        %v839 = vpop.permute.xlu0 %838
        %840 = vrot.lane.b32.xlu0 %v758, 12
        %v841 = vpop.permute.xlu0 %840
        %842 = vrot.lane.b32.xlu0 %v759, 12
        %v843 = vpop.permute.xlu0 %842
        %844 = vrot.lane.b32.xlu0 %v760, 12
        %v845 = vpop.permute.xlu0 %844
        %846 = vrot.lane.b32.xlu0 %v761, 12
        %v847 = vpop.permute.xlu0 %846
        %848 = vrot.lane.b32.xlu0 %v762, 12
        %v849 = vpop.permute.xlu0 %848
        %850 = vrot.lane.b32.xlu0 %v763, 12
        %v851 = vpop.permute.xlu0 %850
        %852 = vrot.lane.b32.xlu0 %v764, 12
        %v853 = vpop.permute.xlu0 %852
        %854 = vrot.lane.b32.xlu0 %v765, 12
        %v855 = vpop.permute.xlu0 %854
        %856 = vrot.lane.b32.xlu0 %v766, 12
        %v857 = vpop.permute.xlu0 %856
        %858 = vrot.lane.b32.xlu0 %v767, 12
        %v859 = vpop.permute.xlu0 %858
        %860 = vrot.lane.b32.xlu0 %v768, 12
        %v861 = vpop.permute.xlu0 %860
        %862 = vrot.lane.b32.xlu0 %v769, 12
        %v863 = vpop.permute.xlu0 %862
        %864 = vrot.lane.b32.xlu0 %v770, 12
        %v865 = vpop.permute.xlu0 %864
        %866 = vrot.lane.b32.xlu0 %v771, 12
        %v867 = vpop.permute.xlu0 %866
        %vm900 = vcmask 130144
        %901 = vst.msk [vmem:[#allocation3] sm:$0xff] %vm900, %v805
        %902 = vst.msk [vmem:[#allocation3 + $0x8] sm:$0xff] %vm900, %v807
        %903 = vst.msk [vmem:[#allocation3 + $0x10] sm:$0xff] %vm900, %v809
        %904 = vst.msk [vmem:[#allocation3 + $0x18] sm:$0xff] %vm900, %v811
        %905 = vst.msk [vmem:[#allocation3 + $0x20] sm:$0xff] %vm900, %v813
        %906 = vst.msk [vmem:[#allocation3 + $0x28] sm:$0xff] %vm900, %v815
        %907 = vst.msk [vmem:[#allocation3 + $0x30] sm:$0xff] %vm900, %v817
        %908 = vst.msk [vmem:[#allocation3 + $0x38] sm:$0xff] %vm900, %v819
        %909 = vst.msk [vmem:[#allocation3 + $0x40] sm:$0xff] %vm900, %v821
        %910 = vst.msk [vmem:[#allocation3 + $0x48] sm:$0xff] %vm900, %v823
        %911 = vst.msk [vmem:[#allocation3 + $0x50] sm:$0xff] %vm900, %v825
        %912 = vst.msk [vmem:[#allocation3 + $0x58] sm:$0xff] %vm900, %v827
        %913 = vst.msk [vmem:[#allocation3 + $0x60] sm:$0xff] %vm900, %v829
        %914 = vst.msk [vmem:[#allocation3 + $0x68] sm:$0xff] %vm900, %v831
        %915 = vst.msk [vmem:[#allocation3 + $0x70] sm:$0xff] %vm900, %v833
        %916 = vst.msk [vmem:[#allocation3 + $0x78] sm:$0xff] %vm900, %v835
        %917 = vst.msk [vmem:[#allocation3 + $0x80] sm:$0xff] %vm900, %v837
        %918 = vst.msk [vmem:[#allocation3 + $0x88] sm:$0xff] %vm900, %v839
        %919 = vst.msk [vmem:[#allocation3 + $0x90] sm:$0xff] %vm900, %v841
        %920 = vst.msk [vmem:[#allocation3 + $0x98] sm:$0xff] %vm900, %v843
        %921 = vst.msk [vmem:[#allocation3 + $0xa0] sm:$0xff] %vm900, %v845
        %922 = vst.msk [vmem:[#allocation3 + $0xa8] sm:$0xff] %vm900, %v847
        %923 = vst.msk [vmem:[#allocation3 + $0xb0] sm:$0xff] %vm900, %v849
        %924 = vst.msk [vmem:[#allocation3 + $0xb8] sm:$0xff] %vm900, %v851
        %925 = vst.msk [vmem:[#allocation3 + $0xc0] sm:$0xff] %vm900, %v853
        %926 = vst.msk [vmem:[#allocation3 + $0xc8] sm:$0xff] %vm900, %v855
        %927 = vst.msk [vmem:[#allocation3 + $0xd0] sm:$0xff] %vm900, %v857
        %928 = vst.msk [vmem:[#allocation3 + $0xd8] sm:$0xff] %vm900, %v859
        %929 = vst.msk [vmem:[#allocation3 + $0xe0] sm:$0xff] %vm900, %v861
        %930 = vst.msk [vmem:[#allocation3 + $0xe8] sm:$0xff] %vm900, %v863
        %931 = vst.msk [vmem:[#allocation3 + $0xf0] sm:$0xff] %vm900, %v865
        %932 = vst.msk [vmem:[#allocation3 + $0xf8] sm:$0xff] %vm900, %v867
        %v933 = vld [vmem:[%s257 + $0x1] sm:$0xff]
        %v934 = vld [vmem:[%s257 + $0x9] sm:$0xff]
        %v935 = vld [vmem:[%s257 + $0x19] sm:$0xff]
        %v936 = vld [vmem:[%s257 + $0x21] sm:$0xff]
        %v937 = vld [vmem:[%s257 + $0x31] sm:$0xff]
        %v938 = vld [vmem:[%s257 + $0x39] sm:$0xff]
        %v939 = vld [vmem:[%s257 + $0x49] sm:$0xff]
        %v940 = vld [vmem:[%s257 + $0x51] sm:$0xff]
        %v941 = vld [vmem:[%s257 + $0x61] sm:$0xff]
        %v942 = vld [vmem:[%s257 + $0x69] sm:$0xff]
        %v943 = vld [vmem:[%s257 + $0x79] sm:$0xff]
        %v944 = vld [vmem:[%s257 + $0x81] sm:$0xff]
        %v945 = vld [vmem:[%s257 + $0x91] sm:$0xff]
        %v946 = vld [vmem:[%s257 + $0x99] sm:$0xff]
        %v947 = vld [vmem:[%s257 + $0xa9] sm:$0xff]
        %v948 = vld [vmem:[%s257 + $0xb1] sm:$0xff]
        %v949 = vld [vmem:[%s257 + $0xc1] sm:$0xff]
        %v950 = vld [vmem:[%s257 + $0xc9] sm:$0xff]
        %v951 = vld [vmem:[%s257 + $0xd9] sm:$0xff]
        %v952 = vld [vmem:[%s257 + $0xe1] sm:$0xff]
        %v953 = vld [vmem:[%s257 + $0xf1] sm:$0xff]
        %v954 = vld [vmem:[%s257 + $0xf9] sm:$0xff]
        %v955 = vld [vmem:[%s257 + $0x109] sm:$0xff]
        %v956 = vld [vmem:[%s257 + $0x111] sm:$0xff]
        %v957 = vld [vmem:[%s257 + $0x121] sm:$0xff]
        %v958 = vld [vmem:[%s257 + $0x129] sm:$0xff]
        %v959 = vld [vmem:[%s257 + $0x139] sm:$0xff]
        %v960 = vld [vmem:[%s257 + $0x141] sm:$0xff]
        %v961 = vld [vmem:[%s257 + $0x151] sm:$0xff]
        %v962 = vld [vmem:[%s257 + $0x159] sm:$0xff]
        %v963 = vld [vmem:[%s257 + $0x169] sm:$0xff]
        %v964 = vld [vmem:[%s257 + $0x171] sm:$0xff]
        %997 = vrot.lane.b32.xlu0 %v933, 16
        %v998 = vpop.permute.xlu0 %997
        %999 = vrot.lane.b32.xlu0 %v934, 16
        %v1000 = vpop.permute.xlu0 %999
        %1001 = vrot.lane.b32.xlu0 %v935, 16
        %v1002 = vpop.permute.xlu0 %1001
        %1003 = vrot.lane.b32.xlu0 %v936, 16
        %v1004 = vpop.permute.xlu0 %1003
        %1005 = vrot.lane.b32.xlu0 %v937, 16
        %v1006 = vpop.permute.xlu0 %1005
        %1007 = vrot.lane.b32.xlu0 %v938, 16
        %v1008 = vpop.permute.xlu0 %1007
        %1009 = vrot.lane.b32.xlu0 %v939, 16
        %v1010 = vpop.permute.xlu0 %1009
        %1011 = vrot.lane.b32.xlu0 %v940, 16
        %v1012 = vpop.permute.xlu0 %1011
        %1013 = vrot.lane.b32.xlu0 %v941, 16
        %v1014 = vpop.permute.xlu0 %1013
        %1015 = vrot.lane.b32.xlu0 %v942, 16
        %v1016 = vpop.permute.xlu0 %1015
        %1017 = vrot.lane.b32.xlu0 %v943, 16
        %v1018 = vpop.permute.xlu0 %1017
        %1019 = vrot.lane.b32.xlu0 %v944, 16
        %v1020 = vpop.permute.xlu0 %1019
        %1021 = vrot.lane.b32.xlu0 %v945, 16
        %v1022 = vpop.permute.xlu0 %1021
        %1023 = vrot.lane.b32.xlu0 %v946, 16
        %v1024 = vpop.permute.xlu0 %1023
        %1025 = vrot.lane.b32.xlu0 %v947, 16
        %v1026 = vpop.permute.xlu0 %1025
        %1027 = vrot.lane.b32.xlu0 %v948, 16
        %v1028 = vpop.permute.xlu0 %1027
        %1029 = vrot.lane.b32.xlu0 %v949, 16
        %v1030 = vpop.permute.xlu0 %1029
        %1031 = vrot.lane.b32.xlu0 %v950, 16
        %v1032 = vpop.permute.xlu0 %1031
        %1033 = vrot.lane.b32.xlu0 %v951, 16
        %v1034 = vpop.permute.xlu0 %1033
        %1035 = vrot.lane.b32.xlu0 %v952, 16
        %v1036 = vpop.permute.xlu0 %1035
        %1037 = vrot.lane.b32.xlu0 %v953, 16
        %v1038 = vpop.permute.xlu0 %1037
        %1039 = vrot.lane.b32.xlu0 %v954, 16
        %v1040 = vpop.permute.xlu0 %1039
        %1041 = vrot.lane.b32.xlu0 %v955, 16
        %v1042 = vpop.permute.xlu0 %1041
        %1043 = vrot.lane.b32.xlu0 %v956, 16
        %v1044 = vpop.permute.xlu0 %1043
        %1045 = vrot.lane.b32.xlu0 %v957, 16
        %v1046 = vpop.permute.xlu0 %1045
        %1047 = vrot.lane.b32.xlu0 %v958, 16
        %v1048 = vpop.permute.xlu0 %1047
        %1049 = vrot.lane.b32.xlu0 %v959, 16
        %v1050 = vpop.permute.xlu0 %1049
        %1051 = vrot.lane.b32.xlu0 %v960, 16
        %v1052 = vpop.permute.xlu0 %1051
        %1053 = vrot.lane.b32.xlu0 %v961, 16
        %v1054 = vpop.permute.xlu0 %1053
        %1055 = vrot.lane.b32.xlu0 %v962, 16
        %v1056 = vpop.permute.xlu0 %1055
        %1057 = vrot.lane.b32.xlu0 %v963, 16
        %v1058 = vpop.permute.xlu0 %1057
        %1059 = vrot.lane.b32.xlu0 %v964, 16
        %v1060 = vpop.permute.xlu0 %1059
        %vm1093 = vcmask 162944
        %1094 = vst.msk [vmem:[#allocation3] sm:$0xff] %vm1093, %v998
        %1095 = vst.msk [vmem:[#allocation3 + $0x8] sm:$0xff] %vm1093, %v1000
        %1096 = vst.msk [vmem:[#allocation3 + $0x10] sm:$0xff] %vm1093, %v1002
        %1097 = vst.msk [vmem:[#allocation3 + $0x18] sm:$0xff] %vm1093, %v1004
        %1098 = vst.msk [vmem:[#allocation3 + $0x20] sm:$0xff] %vm1093, %v1006
        %1099 = vst.msk [vmem:[#allocation3 + $0x28] sm:$0xff] %vm1093, %v1008
        %1100 = vst.msk [vmem:[#allocation3 + $0x30] sm:$0xff] %vm1093, %v1010
        %1101 = vst.msk [vmem:[#allocation3 + $0x38] sm:$0xff] %vm1093, %v1012
        %1102 = vst.msk [vmem:[#allocation3 + $0x40] sm:$0xff] %vm1093, %v1014
        %1103 = vst.msk [vmem:[#allocation3 + $0x48] sm:$0xff] %vm1093, %v1016
        %1104 = vst.msk [vmem:[#allocation3 + $0x50] sm:$0xff] %vm1093, %v1018
        %1105 = vst.msk [vmem:[#allocation3 + $0x58] sm:$0xff] %vm1093, %v1020
        %1106 = vst.msk [vmem:[#allocation3 + $0x60] sm:$0xff] %vm1093, %v1022
        %1107 = vst.msk [vmem:[#allocation3 + $0x68] sm:$0xff] %vm1093, %v1024
        %1108 = vst.msk [vmem:[#allocation3 + $0x70] sm:$0xff] %vm1093, %v1026
        %1109 = vst.msk [vmem:[#allocation3 + $0x78] sm:$0xff] %vm1093, %v1028
        %1110 = vst.msk [vmem:[#allocation3 + $0x80] sm:$0xff] %vm1093, %v1030
        %1111 = vst.msk [vmem:[#allocation3 + $0x88] sm:$0xff] %vm1093, %v1032
        %1112 = vst.msk [vmem:[#allocation3 + $0x90] sm:$0xff] %vm1093, %v1034
        %1113 = vst.msk [vmem:[#allocation3 + $0x98] sm:$0xff] %vm1093, %v1036
        %1114 = vst.msk [vmem:[#allocation3 + $0xa0] sm:$0xff] %vm1093, %v1038
        %1115 = vst.msk [vmem:[#allocation3 + $0xa8] sm:$0xff] %vm1093, %v1040
        %1116 = vst.msk [vmem:[#allocation3 + $0xb0] sm:$0xff] %vm1093, %v1042
        %1117 = vst.msk [vmem:[#allocation3 + $0xb8] sm:$0xff] %vm1093, %v1044
        %1118 = vst.msk [vmem:[#allocation3 + $0xc0] sm:$0xff] %vm1093, %v1046
        %1119 = vst.msk [vmem:[#allocation3 + $0xc8] sm:$0xff] %vm1093, %v1048
        %1120 = vst.msk [vmem:[#allocation3 + $0xd0] sm:$0xff] %vm1093, %v1050
        %1121 = vst.msk [vmem:[#allocation3 + $0xd8] sm:$0xff] %vm1093, %v1052
        %1122 = vst.msk [vmem:[#allocation3 + $0xe0] sm:$0xff] %vm1093, %v1054
        %1123 = vst.msk [vmem:[#allocation3 + $0xe8] sm:$0xff] %vm1093, %v1056
        %1124 = vst.msk [vmem:[#allocation3 + $0xf0] sm:$0xff] %vm1093, %v1058
        %1125 = vst.msk [vmem:[#allocation3 + $0xf8] sm:$0xff] %vm1093, %v1060
        %v1126 = vld [vmem:[%s257 + $0x2] sm:$0xff]
        %v1127 = vld [vmem:[%s257 + $0xa] sm:$0xff]
        %v1128 = vld [vmem:[%s257 + $0x1a] sm:$0xff]
        %v1129 = vld [vmem:[%s257 + $0x22] sm:$0xff]
        %v1130 = vld [vmem:[%s257 + $0x32] sm:$0xff]
        %v1131 = vld [vmem:[%s257 + $0x3a] sm:$0xff]
        %v1132 = vld [vmem:[%s257 + $0x4a] sm:$0xff]
        %v1133 = vld [vmem:[%s257 + $0x52] sm:$0xff]
        %v1134 = vld [vmem:[%s257 + $0x62] sm:$0xff]
        %v1135 = vld [vmem:[%s257 + $0x6a] sm:$0xff]
        %v1136 = vld [vmem:[%s257 + $0x7a] sm:$0xff]
        %v1137 = vld [vmem:[%s257 + $0x82] sm:$0xff]
        %v1138 = vld [vmem:[%s257 + $0x92] sm:$0xff]
        %v1139 = vld [vmem:[%s257 + $0x9a] sm:$0xff]
        %v1140 = vld [vmem:[%s257 + $0xaa] sm:$0xff]
        %v1141 = vld [vmem:[%s257 + $0xb2] sm:$0xff]
        %v1142 = vld [vmem:[%s257 + $0xc2] sm:$0xff]
        %v1143 = vld [vmem:[%s257 + $0xca] sm:$0xff]
        %v1144 = vld [vmem:[%s257 + $0xda] sm:$0xff]
        %v1145 = vld [vmem:[%s257 + $0xe2] sm:$0xff]
        %v1146 = vld [vmem:[%s257 + $0xf2] sm:$0xff]
        %v1147 = vld [vmem:[%s257 + $0xfa] sm:$0xff]
        %v1148 = vld [vmem:[%s257 + $0x10a] sm:$0xff]
        %v1149 = vld [vmem:[%s257 + $0x112] sm:$0xff]
        %v1150 = vld [vmem:[%s257 + $0x122] sm:$0xff]
        %v1151 = vld [vmem:[%s257 + $0x12a] sm:$0xff]
        %v1152 = vld [vmem:[%s257 + $0x13a] sm:$0xff]
        %v1153 = vld [vmem:[%s257 + $0x142] sm:$0xff]
        %v1154 = vld [vmem:[%s257 + $0x152] sm:$0xff]
        %v1155 = vld [vmem:[%s257 + $0x15a] sm:$0xff]
        %v1156 = vld [vmem:[%s257 + $0x16a] sm:$0xff]
        %v1157 = vld [vmem:[%s257 + $0x172] sm:$0xff]
        %1190 = vrot.lane.b32.xlu0 %v1126, 20
        %v1191 = vpop.permute.xlu0 %1190
        %1192 = vrot.lane.b32.xlu0 %v1127, 20
        %v1193 = vpop.permute.xlu0 %1192
        %1194 = vrot.lane.b32.xlu0 %v1128, 20
        %v1195 = vpop.permute.xlu0 %1194
        %1196 = vrot.lane.b32.xlu0 %v1129, 20
        %v1197 = vpop.permute.xlu0 %1196
        %1198 = vrot.lane.b32.xlu0 %v1130, 20
        %v1199 = vpop.permute.xlu0 %1198
        %1200 = vrot.lane.b32.xlu0 %v1131, 20
        %v1201 = vpop.permute.xlu0 %1200
        %1202 = vrot.lane.b32.xlu0 %v1132, 20
        %v1203 = vpop.permute.xlu0 %1202
        %1204 = vrot.lane.b32.xlu0 %v1133, 20
        %v1205 = vpop.permute.xlu0 %1204
        %1206 = vrot.lane.b32.xlu0 %v1134, 20
        %v1207 = vpop.permute.xlu0 %1206
        %1208 = vrot.lane.b32.xlu0 %v1135, 20
        %v1209 = vpop.permute.xlu0 %1208
        %1210 = vrot.lane.b32.xlu0 %v1136, 20
        %v1211 = vpop.permute.xlu0 %1210
        %1212 = vrot.lane.b32.xlu0 %v1137, 20
        %v1213 = vpop.permute.xlu0 %1212
        %1214 = vrot.lane.b32.xlu0 %v1138, 20
        %v1215 = vpop.permute.xlu0 %1214
        %1216 = vrot.lane.b32.xlu0 %v1139, 20
        %v1217 = vpop.permute.xlu0 %1216
        %1218 = vrot.lane.b32.xlu0 %v1140, 20
        %v1219 = vpop.permute.xlu0 %1218
        %1220 = vrot.lane.b32.xlu0 %v1141, 20
        %v1221 = vpop.permute.xlu0 %1220
        %1222 = vrot.lane.b32.xlu0 %v1142, 20
        %v1223 = vpop.permute.xlu0 %1222
        %1224 = vrot.lane.b32.xlu0 %v1143, 20
        %v1225 = vpop.permute.xlu0 %1224
        %1226 = vrot.lane.b32.xlu0 %v1144, 20
        %v1227 = vpop.permute.xlu0 %1226
        %1228 = vrot.lane.b32.xlu0 %v1145, 20
        %v1229 = vpop.permute.xlu0 %1228
        %1230 = vrot.lane.b32.xlu0 %v1146, 20
        %v1231 = vpop.permute.xlu0 %1230
        %1232 = vrot.lane.b32.xlu0 %v1147, 20
        %v1233 = vpop.permute.xlu0 %1232
        %1234 = vrot.lane.b32.xlu0 %v1148, 20
        %v1235 = vpop.permute.xlu0 %1234
        %1236 = vrot.lane.b32.xlu0 %v1149, 20
        %v1237 = vpop.permute.xlu0 %1236
        %1238 = vrot.lane.b32.xlu0 %v1150, 20
        %v1239 = vpop.permute.xlu0 %1238
        %1240 = vrot.lane.b32.xlu0 %v1151, 20
        %v1241 = vpop.permute.xlu0 %1240
        %1242 = vrot.lane.b32.xlu0 %v1152, 20
        %v1243 = vpop.permute.xlu0 %1242
        %1244 = vrot.lane.b32.xlu0 %v1153, 20
        %v1245 = vpop.permute.xlu0 %1244
        %1246 = vrot.lane.b32.xlu0 %v1154, 20
        %v1247 = vpop.permute.xlu0 %1246
        %1248 = vrot.lane.b32.xlu0 %v1155, 20
        %v1249 = vpop.permute.xlu0 %1248
        %1250 = vrot.lane.b32.xlu0 %v1156, 20
        %v1251 = vpop.permute.xlu0 %1250
        %1252 = vrot.lane.b32.xlu0 %v1157, 20
        %v1253 = vpop.permute.xlu0 %1252
        %vm1286 = vcmask 195744
        %1287 = vst.msk [vmem:[#allocation3] sm:$0xff] %vm1286, %v1191
        %1288 = vst.msk [vmem:[#allocation3 + $0x8] sm:$0xff] %vm1286, %v1193
        %1289 = vst.msk [vmem:[#allocation3 + $0x10] sm:$0xff] %vm1286, %v1195
        %1290 = vst.msk [vmem:[#allocation3 + $0x18] sm:$0xff] %vm1286, %v1197
        %1291 = vst.msk [vmem:[#allocation3 + $0x20] sm:$0xff] %vm1286, %v1199
        %1292 = vst.msk [vmem:[#allocation3 + $0x28] sm:$0xff] %vm1286, %v1201
        %1293 = vst.msk [vmem:[#allocation3 + $0x30] sm:$0xff] %vm1286, %v1203
        %1294 = vst.msk [vmem:[#allocation3 + $0x38] sm:$0xff] %vm1286, %v1205
        %1295 = vst.msk [vmem:[#allocation3 + $0x40] sm:$0xff] %vm1286, %v1207
        %1296 = vst.msk [vmem:[#allocation3 + $0x48] sm:$0xff] %vm1286, %v1209
        %1297 = vst.msk [vmem:[#allocation3 + $0x50] sm:$0xff] %vm1286, %v1211
        %1298 = vst.msk [vmem:[#allocation3 + $0x58] sm:$0xff] %vm1286, %v1213
        %1299 = vst.msk [vmem:[#allocation3 + $0x60] sm:$0xff] %vm1286, %v1215
        %1300 = vst.msk [vmem:[#allocation3 + $0x68] sm:$0xff] %vm1286, %v1217
        %1301 = vst.msk [vmem:[#allocation3 + $0x70] sm:$0xff] %vm1286, %v1219
        %1302 = vst.msk [vmem:[#allocation3 + $0x78] sm:$0xff] %vm1286, %v1221
        %1303 = vst.msk [vmem:[#allocation3 + $0x80] sm:$0xff] %vm1286, %v1223
        %1304 = vst.msk [vmem:[#allocation3 + $0x88] sm:$0xff] %vm1286, %v1225
        %1305 = vst.msk [vmem:[#allocation3 + $0x90] sm:$0xff] %vm1286, %v1227
        %1306 = vst.msk [vmem:[#allocation3 + $0x98] sm:$0xff] %vm1286, %v1229
        %1307 = vst.msk [vmem:[#allocation3 + $0xa0] sm:$0xff] %vm1286, %v1231
        %1308 = vst.msk [vmem:[#allocation3 + $0xa8] sm:$0xff] %vm1286, %v1233
        %1309 = vst.msk [vmem:[#allocation3 + $0xb0] sm:$0xff] %vm1286, %v1235
        %1310 = vst.msk [vmem:[#allocation3 + $0xb8] sm:$0xff] %vm1286, %v1237
        %1311 = vst.msk [vmem:[#allocation3 + $0xc0] sm:$0xff] %vm1286, %v1239
        %1312 = vst.msk [vmem:[#allocation3 + $0xc8] sm:$0xff] %vm1286, %v1241
        %1313 = vst.msk [vmem:[#allocation3 + $0xd0] sm:$0xff] %vm1286, %v1243
        %1314 = vst.msk [vmem:[#allocation3 + $0xd8] sm:$0xff] %vm1286, %v1245
        %1315 = vst.msk [vmem:[#allocation3 + $0xe0] sm:$0xff] %vm1286, %v1247
        %1316 = vst.msk [vmem:[#allocation3 + $0xe8] sm:$0xff] %vm1286, %v1249
        %1317 = vst.msk [vmem:[#allocation3 + $0xf0] sm:$0xff] %vm1286, %v1251
        %1318 = vst.msk [vmem:[#allocation3 + $0xf8] sm:$0xff] %vm1286, %v1253
        %s1319 = scalar_lea.vmem [#allocation2], 48
        %v1320 = vld [vmem:[%s1319] sm:$0xff]
        %v1321 = vld [vmem:[%s1319 + $0x8] sm:$0xff]
        %v1322 = vld [vmem:[%s1319 + $0x18] sm:$0xff]
        %v1323 = vld [vmem:[%s1319 + $0x20] sm:$0xff]
        %v1324 = vld [vmem:[%s1319 + $0x30] sm:$0xff]
        %v1325 = vld [vmem:[%s1319 + $0x38] sm:$0xff]
        %v1326 = vld [vmem:[%s1319 + $0x48] sm:$0xff]
        %v1327 = vld [vmem:[%s1319 + $0x50] sm:$0xff]
        %v1328 = vld [vmem:[%s1319 + $0x60] sm:$0xff]
        %v1329 = vld [vmem:[%s1319 + $0x68] sm:$0xff]
        %v1330 = vld [vmem:[%s1319 + $0x78] sm:$0xff]
        %v1331 = vld [vmem:[%s1319 + $0x80] sm:$0xff]
        %v1332 = vld [vmem:[%s1319 + $0x90] sm:$0xff]
        %v1333 = vld [vmem:[%s1319 + $0x98] sm:$0xff]
        %v1334 = vld [vmem:[%s1319 + $0xa8] sm:$0xff]
        %v1335 = vld [vmem:[%s1319 + $0xb0] sm:$0xff]
        %v1336 = vld [vmem:[%s1319 + $0xc0] sm:$0xff]
        %v1337 = vld [vmem:[%s1319 + $0xc8] sm:$0xff]
        %v1338 = vld [vmem:[%s1319 + $0xd8] sm:$0xff]
        %v1339 = vld [vmem:[%s1319 + $0xe0] sm:$0xff]
        %v1340 = vld [vmem:[%s1319 + $0xf0] sm:$0xff]
        %v1341 = vld [vmem:[%s1319 + $0xf8] sm:$0xff]
        %v1342 = vld [vmem:[%s1319 + $0x108] sm:$0xff]
        %v1343 = vld [vmem:[%s1319 + $0x110] sm:$0xff]
        %v1344 = vld [vmem:[%s1319 + $0x120] sm:$0xff]
        %v1345 = vld [vmem:[%s1319 + $0x128] sm:$0xff]
        %v1346 = vld [vmem:[%s1319 + $0x138] sm:$0xff]
        %v1347 = vld [vmem:[%s1319 + $0x140] sm:$0xff]
        %v1348 = vld [vmem:[%s1319 + $0x150] sm:$0xff]
        %v1349 = vld [vmem:[%s1319 + $0x158] sm:$0xff]
        %v1350 = vld [vmem:[%s1319 + $0x168] sm:$0xff]
        %v1351 = vld [vmem:[%s1319 + $0x170] sm:$0xff]
        %1384 = vrot.lane.b32.xlu0 %v1320, 24
        %v1385 = vpop.permute.xlu0 %1384
        %1386 = vrot.lane.b32.xlu0 %v1321, 24
        %v1387 = vpop.permute.xlu0 %1386
        %1388 = vrot.lane.b32.xlu0 %v1322, 24
        %v1389 = vpop.permute.xlu0 %1388
        %1390 = vrot.lane.b32.xlu0 %v1323, 24
        %v1391 = vpop.permute.xlu0 %1390
        %1392 = vrot.lane.b32.xlu0 %v1324, 24
        %v1393 = vpop.permute.xlu0 %1392
        %1394 = vrot.lane.b32.xlu0 %v1325, 24
        %v1395 = vpop.permute.xlu0 %1394
        %1396 = vrot.lane.b32.xlu0 %v1326, 24
        %v1397 = vpop.permute.xlu0 %1396
        %1398 = vrot.lane.b32.xlu0 %v1327, 24
        %v1399 = vpop.permute.xlu0 %1398
        %1400 = vrot.lane.b32.xlu0 %v1328, 24
        %v1401 = vpop.permute.xlu0 %1400
        %1402 = vrot.lane.b32.xlu0 %v1329, 24
        %v1403 = vpop.permute.xlu0 %1402
        %1404 = vrot.lane.b32.xlu0 %v1330, 24
        %v1405 = vpop.permute.xlu0 %1404
        %1406 = vrot.lane.b32.xlu0 %v1331, 24
        %v1407 = vpop.permute.xlu0 %1406
        %1408 = vrot.lane.b32.xlu0 %v1332, 24
        %v1409 = vpop.permute.xlu0 %1408
        %1410 = vrot.lane.b32.xlu0 %v1333, 24
        %v1411 = vpop.permute.xlu0 %1410
        %1412 = vrot.lane.b32.xlu0 %v1334, 24
        %v1413 = vpop.permute.xlu0 %1412
        %1414 = vrot.lane.b32.xlu0 %v1335, 24
        %v1415 = vpop.permute.xlu0 %1414
        %1416 = vrot.lane.b32.xlu0 %v1336, 24
        %v1417 = vpop.permute.xlu0 %1416
        %1418 = vrot.lane.b32.xlu0 %v1337, 24
        %v1419 = vpop.permute.xlu0 %1418
        %1420 = vrot.lane.b32.xlu0 %v1338, 24
        %v1421 = vpop.permute.xlu0 %1420
        %1422 = vrot.lane.b32.xlu0 %v1339, 24
        %v1423 = vpop.permute.xlu0 %1422
        %1424 = vrot.lane.b32.xlu0 %v1340, 24
        %v1425 = vpop.permute.xlu0 %1424
        %1426 = vrot.lane.b32.xlu0 %v1341, 24
        %v1427 = vpop.permute.xlu0 %1426
        %1428 = vrot.lane.b32.xlu0 %v1342, 24
        %v1429 = vpop.permute.xlu0 %1428
        %1430 = vrot.lane.b32.xlu0 %v1343, 24
        %v1431 = vpop.permute.xlu0 %1430
        %1432 = vrot.lane.b32.xlu0 %v1344, 24
        %v1433 = vpop.permute.xlu0 %1432
        %1434 = vrot.lane.b32.xlu0 %v1345, 24
        %v1435 = vpop.permute.xlu0 %1434
        %1436 = vrot.lane.b32.xlu0 %v1346, 24
        %v1437 = vpop.permute.xlu0 %1436
        %1438 = vrot.lane.b32.xlu0 %v1347, 24
        %v1439 = vpop.permute.xlu0 %1438
        %1440 = vrot.lane.b32.xlu0 %v1348, 24
        %v1441 = vpop.permute.xlu0 %1440
        %1442 = vrot.lane.b32.xlu0 %v1349, 24
        %v1443 = vpop.permute.xlu0 %1442
        %1444 = vrot.lane.b32.xlu0 %v1350, 24
        %v1445 = vpop.permute.xlu0 %1444
        %1446 = vrot.lane.b32.xlu0 %v1351, 24
        %v1447 = vpop.permute.xlu0 %1446
        %vm1480 = vcmask 228544
        %1481 = vst.msk [vmem:[#allocation3] sm:$0xff] %vm1480, %v1385
        %1482 = vst.msk [vmem:[#allocation3 + $0x8] sm:$0xff] %vm1480, %v1387
        %1483 = vst.msk [vmem:[#allocation3 + $0x10] sm:$0xff] %vm1480, %v1389
        %1484 = vst.msk [vmem:[#allocation3 + $0x18] sm:$0xff] %vm1480, %v1391
        %1485 = vst.msk [vmem:[#allocation3 + $0x20] sm:$0xff] %vm1480, %v1393
        %1486 = vst.msk [vmem:[#allocation3 + $0x28] sm:$0xff] %vm1480, %v1395
        %1487 = vst.msk [vmem:[#allocation3 + $0x30] sm:$0xff] %vm1480, %v1397
        %1488 = vst.msk [vmem:[#allocation3 + $0x38] sm:$0xff] %vm1480, %v1399
        %1489 = vst.msk [vmem:[#allocation3 + $0x40] sm:$0xff] %vm1480, %v1401
        %1490 = vst.msk [vmem:[#allocation3 + $0x48] sm:$0xff] %vm1480, %v1403
        %1491 = vst.msk [vmem:[#allocation3 + $0x50] sm:$0xff] %vm1480, %v1405
        %1492 = vst.msk [vmem:[#allocation3 + $0x58] sm:$0xff] %vm1480, %v1407
        %1493 = vst.msk [vmem:[#allocation3 + $0x60] sm:$0xff] %vm1480, %v1409
        %1494 = vst.msk [vmem:[#allocation3 + $0x68] sm:$0xff] %vm1480, %v1411
        %1495 = vst.msk [vmem:[#allocation3 + $0x70] sm:$0xff] %vm1480, %v1413
        %1496 = vst.msk [vmem:[#allocation3 + $0x78] sm:$0xff] %vm1480, %v1415
        %1497 = vst.msk [vmem:[#allocation3 + $0x80] sm:$0xff] %vm1480, %v1417
        %1498 = vst.msk [vmem:[#allocation3 + $0x88] sm:$0xff] %vm1480, %v1419
        %1499 = vst.msk [vmem:[#allocation3 + $0x90] sm:$0xff] %vm1480, %v1421
        %1500 = vst.msk [vmem:[#allocation3 + $0x98] sm:$0xff] %vm1480, %v1423
        %1501 = vst.msk [vmem:[#allocation3 + $0xa0] sm:$0xff] %vm1480, %v1425
        %1502 = vst.msk [vmem:[#allocation3 + $0xa8] sm:$0xff] %vm1480, %v1427
        %1503 = vst.msk [vmem:[#allocation3 + $0xb0] sm:$0xff] %vm1480, %v1429
        %1504 = vst.msk [vmem:[#allocation3 + $0xb8] sm:$0xff] %vm1480, %v1431
        %1505 = vst.msk [vmem:[#allocation3 + $0xc0] sm:$0xff] %vm1480, %v1433
        %1506 = vst.msk [vmem:[#allocation3 + $0xc8] sm:$0xff] %vm1480, %v1435
        %1507 = vst.msk [vmem:[#allocation3 + $0xd0] sm:$0xff] %vm1480, %v1437
        %1508 = vst.msk [vmem:[#allocation3 + $0xd8] sm:$0xff] %vm1480, %v1439
        %1509 = vst.msk [vmem:[#allocation3 + $0xe0] sm:$0xff] %vm1480, %v1441
        %1510 = vst.msk [vmem:[#allocation3 + $0xe8] sm:$0xff] %vm1480, %v1443
        %1511 = vst.msk [vmem:[#allocation3 + $0xf0] sm:$0xff] %vm1480, %v1445
        %1512 = vst.msk [vmem:[#allocation3 + $0xf8] sm:$0xff] %vm1480, %v1447
        %v1513 = vld [vmem:[%s1319 + $0x1] sm:$0xff]
        %v1514 = vld [vmem:[%s1319 + $0x9] sm:$0xff]
        %v1515 = vld [vmem:[%s1319 + $0x19] sm:$0xff]
        %v1516 = vld [vmem:[%s1319 + $0x21] sm:$0xff]
        %v1517 = vld [vmem:[%s1319 + $0x31] sm:$0xff]
        %v1518 = vld [vmem:[%s1319 + $0x39] sm:$0xff]
        %v1519 = vld [vmem:[%s1319 + $0x49] sm:$0xff]
        %v1520 = vld [vmem:[%s1319 + $0x51] sm:$0xff]
        %v1521 = vld [vmem:[%s1319 + $0x61] sm:$0xff]
        %v1522 = vld [vmem:[%s1319 + $0x69] sm:$0xff]
        %v1523 = vld [vmem:[%s1319 + $0x79] sm:$0xff]
        %v1524 = vld [vmem:[%s1319 + $0x81] sm:$0xff]
        %v1525 = vld [vmem:[%s1319 + $0x91] sm:$0xff]
        %v1526 = vld [vmem:[%s1319 + $0x99] sm:$0xff]
        %v1527 = vld [vmem:[%s1319 + $0xa9] sm:$0xff]
        %v1528 = vld [vmem:[%s1319 + $0xb1] sm:$0xff]
        %v1529 = vld [vmem:[%s1319 + $0xc1] sm:$0xff]
        %v1530 = vld [vmem:[%s1319 + $0xc9] sm:$0xff]
        %v1531 = vld [vmem:[%s1319 + $0xd9] sm:$0xff]
        %v1532 = vld [vmem:[%s1319 + $0xe1] sm:$0xff]
        %v1533 = vld [vmem:[%s1319 + $0xf1] sm:$0xff]
        %v1534 = vld [vmem:[%s1319 + $0xf9] sm:$0xff]
        %v1535 = vld [vmem:[%s1319 + $0x109] sm:$0xff]
        %v1536 = vld [vmem:[%s1319 + $0x111] sm:$0xff]
        %v1537 = vld [vmem:[%s1319 + $0x121] sm:$0xff]
        %v1538 = vld [vmem:[%s1319 + $0x129] sm:$0xff]
        %v1539 = vld [vmem:[%s1319 + $0x139] sm:$0xff]
        %v1540 = vld [vmem:[%s1319 + $0x141] sm:$0xff]
        %v1541 = vld [vmem:[%s1319 + $0x151] sm:$0xff]
        %v1542 = vld [vmem:[%s1319 + $0x159] sm:$0xff]
        %v1543 = vld [vmem:[%s1319 + $0x169] sm:$0xff]
        %v1544 = vld [vmem:[%s1319 + $0x171] sm:$0xff]
        %1577 = vrot.lane.b32.xlu0 %v1513, 28
        %v1578 = vpop.permute.xlu0 %1577
        %1579 = vrot.lane.b32.xlu0 %v1514, 28
        %v1580 = vpop.permute.xlu0 %1579
        %1581 = vrot.lane.b32.xlu0 %v1515, 28
        %v1582 = vpop.permute.xlu0 %1581
        %1583 = vrot.lane.b32.xlu0 %v1516, 28
        %v1584 = vpop.permute.xlu0 %1583
        %1585 = vrot.lane.b32.xlu0 %v1517, 28
        %v1586 = vpop.permute.xlu0 %1585
        %1587 = vrot.lane.b32.xlu0 %v1518, 28
        %v1588 = vpop.permute.xlu0 %1587
        %1589 = vrot.lane.b32.xlu0 %v1519, 28
        %v1590 = vpop.permute.xlu0 %1589
        %1591 = vrot.lane.b32.xlu0 %v1520, 28
        %v1592 = vpop.permute.xlu0 %1591
        %1593 = vrot.lane.b32.xlu0 %v1521, 28
        %v1594 = vpop.permute.xlu0 %1593
        %1595 = vrot.lane.b32.xlu0 %v1522, 28
        %v1596 = vpop.permute.xlu0 %1595
        %1597 = vrot.lane.b32.xlu0 %v1523, 28
        %v1598 = vpop.permute.xlu0 %1597
        %1599 = vrot.lane.b32.xlu0 %v1524, 28
        %v1600 = vpop.permute.xlu0 %1599
        %1601 = vrot.lane.b32.xlu0 %v1525, 28
        %v1602 = vpop.permute.xlu0 %1601
        %1603 = vrot.lane.b32.xlu0 %v1526, 28
        %v1604 = vpop.permute.xlu0 %1603
        %1605 = vrot.lane.b32.xlu0 %v1527, 28
        %v1606 = vpop.permute.xlu0 %1605
        %1607 = vrot.lane.b32.xlu0 %v1528, 28
        %v1608 = vpop.permute.xlu0 %1607
        %1609 = vrot.lane.b32.xlu0 %v1529, 28
        %v1610 = vpop.permute.xlu0 %1609
        %1611 = vrot.lane.b32.xlu0 %v1530, 28
        %v1612 = vpop.permute.xlu0 %1611
        %1613 = vrot.lane.b32.xlu0 %v1531, 28
        %v1614 = vpop.permute.xlu0 %1613
        %1615 = vrot.lane.b32.xlu0 %v1532, 28
        %v1616 = vpop.permute.xlu0 %1615
        %1617 = vrot.lane.b32.xlu0 %v1533, 28
        %v1618 = vpop.permute.xlu0 %1617
        %1619 = vrot.lane.b32.xlu0 %v1534, 28
        %v1620 = vpop.permute.xlu0 %1619
        %1621 = vrot.lane.b32.xlu0 %v1535, 28
        %v1622 = vpop.permute.xlu0 %1621
        %1623 = vrot.lane.b32.xlu0 %v1536, 28
        %v1624 = vpop.permute.xlu0 %1623
        %1625 = vrot.lane.b32.xlu0 %v1537, 28
        %v1626 = vpop.permute.xlu0 %1625
        %1627 = vrot.lane.b32.xlu0 %v1538, 28
        %v1628 = vpop.permute.xlu0 %1627
        %1629 = vrot.lane.b32.xlu0 %v1539, 28
        %v1630 = vpop.permute.xlu0 %1629
        %1631 = vrot.lane.b32.xlu0 %v1540, 28
        %v1632 = vpop.permute.xlu0 %1631
        %1633 = vrot.lane.b32.xlu0 %v1541, 28
        %v1634 = vpop.permute.xlu0 %1633
        %1635 = vrot.lane.b32.xlu0 %v1542, 28
        %v1636 = vpop.permute.xlu0 %1635
        %1637 = vrot.lane.b32.xlu0 %v1543, 28
        %v1638 = vpop.permute.xlu0 %1637
        %1639 = vrot.lane.b32.xlu0 %v1544, 28
        %v1640 = vpop.permute.xlu0 %1639
        %vm1673 = vcmask 261344
        %1674 = vst.msk [vmem:[#allocation3] sm:$0xff] %vm1673, %v1578
        %1675 = vst.msk [vmem:[#allocation3 + $0x8] sm:$0xff] %vm1673, %v1580
        %1676 = vst.msk [vmem:[#allocation3 + $0x10] sm:$0xff] %vm1673, %v1582
        %1677 = vst.msk [vmem:[#allocation3 + $0x18] sm:$0xff] %vm1673, %v1584
        %1678 = vst.msk [vmem:[#allocation3 + $0x20] sm:$0xff] %vm1673, %v1586
        %1679 = vst.msk [vmem:[#allocation3 + $0x28] sm:$0xff] %vm1673, %v1588
        %1680 = vst.msk [vmem:[#allocation3 + $0x30] sm:$0xff] %vm1673, %v1590
        %1681 = vst.msk [vmem:[#allocation3 + $0x38] sm:$0xff] %vm1673, %v1592
        %1682 = vst.msk [vmem:[#allocation3 + $0x40] sm:$0xff] %vm1673, %v1594
        %1683 = vst.msk [vmem:[#allocation3 + $0x48] sm:$0xff] %vm1673, %v1596
        %1684 = vst.msk [vmem:[#allocation3 + $0x50] sm:$0xff] %vm1673, %v1598
        %1685 = vst.msk [vmem:[#allocation3 + $0x58] sm:$0xff] %vm1673, %v1600
        %1686 = vst.msk [vmem:[#allocation3 + $0x60] sm:$0xff] %vm1673, %v1602
        %1687 = vst.msk [vmem:[#allocation3 + $0x68] sm:$0xff] %vm1673, %v1604
        %1688 = vst.msk [vmem:[#allocation3 + $0x70] sm:$0xff] %vm1673, %v1606
        %1689 = vst.msk [vmem:[#allocation3 + $0x78] sm:$0xff] %vm1673, %v1608
        %1690 = vst.msk [vmem:[#allocation3 + $0x80] sm:$0xff] %vm1673, %v1610
        %1691 = vst.msk [vmem:[#allocation3 + $0x88] sm:$0xff] %vm1673, %v1612
        %1692 = vst.msk [vmem:[#allocation3 + $0x90] sm:$0xff] %vm1673, %v1614
        %1693 = vst.msk [vmem:[#allocation3 + $0x98] sm:$0xff] %vm1673, %v1616
        %1694 = vst.msk [vmem:[#allocation3 + $0xa0] sm:$0xff] %vm1673, %v1618
        %1695 = vst.msk [vmem:[#allocation3 + $0xa8] sm:$0xff] %vm1673, %v1620
        %1696 = vst.msk [vmem:[#allocation3 + $0xb0] sm:$0xff] %vm1673, %v1622
        %1697 = vst.msk [vmem:[#allocation3 + $0xb8] sm:$0xff] %vm1673, %v1624
        %1698 = vst.msk [vmem:[#allocation3 + $0xc0] sm:$0xff] %vm1673, %v1626
        %1699 = vst.msk [vmem:[#allocation3 + $0xc8] sm:$0xff] %vm1673, %v1628
        %1700 = vst.msk [vmem:[#allocation3 + $0xd0] sm:$0xff] %vm1673, %v1630
        %1701 = vst.msk [vmem:[#allocation3 + $0xd8] sm:$0xff] %vm1673, %v1632
        %1702 = vst.msk [vmem:[#allocation3 + $0xe0] sm:$0xff] %vm1673, %v1634
        %1703 = vst.msk [vmem:[#allocation3 + $0xe8] sm:$0xff] %vm1673, %v1636
        %1704 = vst.msk [vmem:[#allocation3 + $0xf0] sm:$0xff] %vm1673, %v1638
        %1705 = vst.msk [vmem:[#allocation3 + $0xf8] sm:$0xff] %vm1673, %v1640
        %v1706 = vld [vmem:[%s1319 + $0x2] sm:$0xff]
        %v1707 = vld [vmem:[%s1319 + $0xa] sm:$0xff]
        %v1708 = vld [vmem:[%s1319 + $0x1a] sm:$0xff]
        %v1709 = vld [vmem:[%s1319 + $0x22] sm:$0xff]
        %v1710 = vld [vmem:[%s1319 + $0x32] sm:$0xff]
        %v1711 = vld [vmem:[%s1319 + $0x3a] sm:$0xff]
        %v1712 = vld [vmem:[%s1319 + $0x4a] sm:$0xff]
        %v1713 = vld [vmem:[%s1319 + $0x52] sm:$0xff]
        %v1714 = vld [vmem:[%s1319 + $0x62] sm:$0xff]
        %v1715 = vld [vmem:[%s1319 + $0x6a] sm:$0xff]
        %v1716 = vld [vmem:[%s1319 + $0x7a] sm:$0xff]
        %v1717 = vld [vmem:[%s1319 + $0x82] sm:$0xff]
        %v1718 = vld [vmem:[%s1319 + $0x92] sm:$0xff]
        %v1719 = vld [vmem:[%s1319 + $0x9a] sm:$0xff]
        %v1720 = vld [vmem:[%s1319 + $0xaa] sm:$0xff]
        %v1721 = vld [vmem:[%s1319 + $0xb2] sm:$0xff]
        %v1722 = vld [vmem:[%s1319 + $0xc2] sm:$0xff]
        %v1723 = vld [vmem:[%s1319 + $0xca] sm:$0xff]
        %v1724 = vld [vmem:[%s1319 + $0xda] sm:$0xff]
        %v1725 = vld [vmem:[%s1319 + $0xe2] sm:$0xff]
        %v1726 = vld [vmem:[%s1319 + $0xf2] sm:$0xff]
        %v1727 = vld [vmem:[%s1319 + $0xfa] sm:$0xff]
        %v1728 = vld [vmem:[%s1319 + $0x10a] sm:$0xff]
        %v1729 = vld [vmem:[%s1319 + $0x112] sm:$0xff]
        %v1730 = vld [vmem:[%s1319 + $0x122] sm:$0xff]
        %v1731 = vld [vmem:[%s1319 + $0x12a] sm:$0xff]
        %v1732 = vld [vmem:[%s1319 + $0x13a] sm:$0xff]
        %v1733 = vld [vmem:[%s1319 + $0x142] sm:$0xff]
        %v1734 = vld [vmem:[%s1319 + $0x152] sm:$0xff]
        %v1735 = vld [vmem:[%s1319 + $0x15a] sm:$0xff]
        %v1736 = vld [vmem:[%s1319 + $0x16a] sm:$0xff]
        %v1737 = vld [vmem:[%s1319 + $0x172] sm:$0xff]
        %1770 = vrot.lane.b32.xlu0 %v1706, 32
        %v1771 = vpop.permute.xlu0 %1770
        %1772 = vrot.lane.b32.xlu0 %v1707, 32
        %v1773 = vpop.permute.xlu0 %1772
        %1774 = vrot.lane.b32.xlu0 %v1708, 32
        %v1775 = vpop.permute.xlu0 %1774
        %1776 = vrot.lane.b32.xlu0 %v1709, 32
        %v1777 = vpop.permute.xlu0 %1776
        %1778 = vrot.lane.b32.xlu0 %v1710, 32
        %v1779 = vpop.permute.xlu0 %1778
        %1780 = vrot.lane.b32.xlu0 %v1711, 32
        %v1781 = vpop.permute.xlu0 %1780
        %1782 = vrot.lane.b32.xlu0 %v1712, 32
        %v1783 = vpop.permute.xlu0 %1782
        %1784 = vrot.lane.b32.xlu0 %v1713, 32
        %v1785 = vpop.permute.xlu0 %1784
        %1786 = vrot.lane.b32.xlu0 %v1714, 32
        %v1787 = vpop.permute.xlu0 %1786
        %1788 = vrot.lane.b32.xlu0 %v1715, 32
        %v1789 = vpop.permute.xlu0 %1788
        %1790 = vrot.lane.b32.xlu0 %v1716, 32
        %v1791 = vpop.permute.xlu0 %1790
        %1792 = vrot.lane.b32.xlu0 %v1717, 32
        %v1793 = vpop.permute.xlu0 %1792
        %1794 = vrot.lane.b32.xlu0 %v1718, 32
        %v1795 = vpop.permute.xlu0 %1794
        %1796 = vrot.lane.b32.xlu0 %v1719, 32
        %v1797 = vpop.permute.xlu0 %1796
        %1798 = vrot.lane.b32.xlu0 %v1720, 32
        %v1799 = vpop.permute.xlu0 %1798
        %1800 = vrot.lane.b32.xlu0 %v1721, 32
        %v1801 = vpop.permute.xlu0 %1800
        %1802 = vrot.lane.b32.xlu0 %v1722, 32
        %v1803 = vpop.permute.xlu0 %1802
        %1804 = vrot.lane.b32.xlu0 %v1723, 32
        %v1805 = vpop.permute.xlu0 %1804
        %1806 = vrot.lane.b32.xlu0 %v1724, 32
        %v1807 = vpop.permute.xlu0 %1806
        %1808 = vrot.lane.b32.xlu0 %v1725, 32
        %v1809 = vpop.permute.xlu0 %1808
        %1810 = vrot.lane.b32.xlu0 %v1726, 32
        %v1811 = vpop.permute.xlu0 %1810
        %1812 = vrot.lane.b32.xlu0 %v1727, 32
        %v1813 = vpop.permute.xlu0 %1812
        %1814 = vrot.lane.b32.xlu0 %v1728, 32
        %v1815 = vpop.permute.xlu0 %1814
        %1816 = vrot.lane.b32.xlu0 %v1729, 32
        %v1817 = vpop.permute.xlu0 %1816
        %1818 = vrot.lane.b32.xlu0 %v1730, 32
        %v1819 = vpop.permute.xlu0 %1818
        %1820 = vrot.lane.b32.xlu0 %v1731, 32
        %v1821 = vpop.permute.xlu0 %1820
        %1822 = vrot.lane.b32.xlu0 %v1732, 32
        %v1823 = vpop.permute.xlu0 %1822
        %1824 = vrot.lane.b32.xlu0 %v1733, 32
        %v1825 = vpop.permute.xlu0 %1824
        %1826 = vrot.lane.b32.xlu0 %v1734, 32
        %v1827 = vpop.permute.xlu0 %1826
        %1828 = vrot.lane.b32.xlu0 %v1735, 32
        %v1829 = vpop.permute.xlu0 %1828
        %1830 = vrot.lane.b32.xlu0 %v1736, 32
        %v1831 = vpop.permute.xlu0 %1830
        %1832 = vrot.lane.b32.xlu0 %v1737, 32
        %v1833 = vpop.permute.xlu0 %1832
        %vm1866 = vcmask 294144
        %1867 = vst.msk [vmem:[#allocation3] sm:$0xff] %vm1866, %v1771
        %1868 = vst.msk [vmem:[#allocation3 + $0x8] sm:$0xff] %vm1866, %v1773
        %1869 = vst.msk [vmem:[#allocation3 + $0x10] sm:$0xff] %vm1866, %v1775
        %1870 = vst.msk [vmem:[#allocation3 + $0x18] sm:$0xff] %vm1866, %v1777
        %1871 = vst.msk [vmem:[#allocation3 + $0x20] sm:$0xff] %vm1866, %v1779
        %1872 = vst.msk [vmem:[#allocation3 + $0x28] sm:$0xff] %vm1866, %v1781
        %1873 = vst.msk [vmem:[#allocation3 + $0x30] sm:$0xff] %vm1866, %v1783
        %1874 = vst.msk [vmem:[#allocation3 + $0x38] sm:$0xff] %vm1866, %v1785
        %1875 = vst.msk [vmem:[#allocation3 + $0x40] sm:$0xff] %vm1866, %v1787
        %1876 = vst.msk [vmem:[#allocation3 + $0x48] sm:$0xff] %vm1866, %v1789
        %1877 = vst.msk [vmem:[#allocation3 + $0x50] sm:$0xff] %vm1866, %v1791
        %1878 = vst.msk [vmem:[#allocation3 + $0x58] sm:$0xff] %vm1866, %v1793
        %1879 = vst.msk [vmem:[#allocation3 + $0x60] sm:$0xff] %vm1866, %v1795
        %1880 = vst.msk [vmem:[#allocation3 + $0x68] sm:$0xff] %vm1866, %v1797
        %1881 = vst.msk [vmem:[#allocation3 + $0x70] sm:$0xff] %vm1866, %v1799
        %1882 = vst.msk [vmem:[#allocation3 + $0x78] sm:$0xff] %vm1866, %v1801
        %1883 = vst.msk [vmem:[#allocation3 + $0x80] sm:$0xff] %vm1866, %v1803
        %1884 = vst.msk [vmem:[#allocation3 + $0x88] sm:$0xff] %vm1866, %v1805
        %1885 = vst.msk [vmem:[#allocation3 + $0x90] sm:$0xff] %vm1866, %v1807
        %1886 = vst.msk [vmem:[#allocation3 + $0x98] sm:$0xff] %vm1866, %v1809
        %1887 = vst.msk [vmem:[#allocation3 + $0xa0] sm:$0xff] %vm1866, %v1811
        %1888 = vst.msk [vmem:[#allocation3 + $0xa8] sm:$0xff] %vm1866, %v1813
        %1889 = vst.msk [vmem:[#allocation3 + $0xb0] sm:$0xff] %vm1866, %v1815
        %1890 = vst.msk [vmem:[#allocation3 + $0xb8] sm:$0xff] %vm1866, %v1817
        %1891 = vst.msk [vmem:[#allocation3 + $0xc0] sm:$0xff] %vm1866, %v1819
        %1892 = vst.msk [vmem:[#allocation3 + $0xc8] sm:$0xff] %vm1866, %v1821
        %1893 = vst.msk [vmem:[#allocation3 + $0xd0] sm:$0xff] %vm1866, %v1823
        %1894 = vst.msk [vmem:[#allocation3 + $0xd8] sm:$0xff] %vm1866, %v1825
        %1895 = vst.msk [vmem:[#allocation3 + $0xe0] sm:$0xff] %vm1866, %v1827
        %1896 = vst.msk [vmem:[#allocation3 + $0xe8] sm:$0xff] %vm1866, %v1829
        %1897 = vst.msk [vmem:[#allocation3 + $0xf0] sm:$0xff] %vm1866, %v1831
        %1898 = vst.msk [vmem:[#allocation3 + $0xf8] sm:$0xff] %vm1866, %v1833
        %v1899 = vld [vmem:[%s1] sm:$0xff]
        %v1900 = vld [vmem:[#allocation3] sm:$0xff]
        %v1901 = vld [vmem:[#allocation3 + $0x8] sm:$0xff]
        %v1902 = vld [vmem:[#allocation3 + $0x10] sm:$0xff]
        %v1903 = vld [vmem:[#allocation3 + $0x18] sm:$0xff]
        %v1904 = vld [vmem:[#allocation3 + $0x20] sm:$0xff]
        %v1905 = vld [vmem:[#allocation3 + $0x28] sm:$0xff]
        %v1906 = vld [vmem:[#allocation3 + $0x30] sm:$0xff]
        %v1907 = vld [vmem:[#allocation3 + $0x38] sm:$0xff]
        %v1908 = vld [vmem:[#allocation3 + $0x40] sm:$0xff]
        %v1909 = vld [vmem:[#allocation3 + $0x48] sm:$0xff]
        %v1910 = vld [vmem:[#allocation3 + $0x50] sm:$0xff]
        %v1911 = vld [vmem:[#allocation3 + $0x58] sm:$0xff]
        %v1912 = vld [vmem:[#allocation3 + $0x60] sm:$0xff]
        %v1913 = vld [vmem:[#allocation3 + $0x68] sm:$0xff]
        %v1914 = vld [vmem:[#allocation3 + $0x70] sm:$0xff]
        %v1915 = vld [vmem:[#allocation3 + $0x78] sm:$0xff]
        %v1916 = vld [vmem:[#allocation3 + $0x80] sm:$0xff]
        %v1917 = vld [vmem:[#allocation3 + $0x88] sm:$0xff]
        %v1918 = vld [vmem:[#allocation3 + $0x90] sm:$0xff]
        %v1919 = vld [vmem:[#allocation3 + $0x98] sm:$0xff]
        %v1920 = vld [vmem:[#allocation3 + $0xa0] sm:$0xff]
        %v1921 = vld [vmem:[#allocation3 + $0xa8] sm:$0xff]
        %v1922 = vld [vmem:[#allocation3 + $0xb0] sm:$0xff]
        %v1923 = vld [vmem:[#allocation3 + $0xb8] sm:$0xff]
        %v1924 = vld [vmem:[#allocation3 + $0xc0] sm:$0xff]
        %v1925 = vld [vmem:[#allocation3 + $0xc8] sm:$0xff]
        %v1926 = vld [vmem:[#allocation3 + $0xd0] sm:$0xff]
        %v1927 = vld [vmem:[#allocation3 + $0xd8] sm:$0xff]
        %v1928 = vld [vmem:[#allocation3 + $0xe0] sm:$0xff]
        %v1929 = vld [vmem:[#allocation3 + $0xe8] sm:$0xff]
        %v1930 = vld [vmem:[#allocation3 + $0xf0] sm:$0xff]
        %v1931 = vld [vmem:[#allocation3 + $0xf8] sm:$0xff]
        %v1932 = vld [vmem:[%s2] sm:$0xff]
        %1934 = vset.pattern.permute.xlu0 0
        %1935 = vperm.xlu0 %1934, %v1932
        %v1936 = vpop.permute.xlu0 %1935
        %vm1938 = vcmask 293888
        %v1940 = vsel %vm1938, %v1899, 0
        %v1943 = vsel %vm1938, %v1900, 0
        %v1946 = vsel %vm1938, %v1901, 0
        %v1949 = vsel %vm1938, %v1902, 0
        %v1952 = vsel %vm1938, %v1903, 0
        %v1955 = vsel %vm1938, %v1904, 0
        %v1958 = vsel %vm1938, %v1905, 0
        %v1961 = vsel %vm1938, %v1906, 0
        %v1964 = vsel %vm1938, %v1907, 0
        %v1967 = vsel %vm1938, %v1908, 0
        %v1970 = vsel %vm1938, %v1909, 0
        %v1973 = vsel %vm1938, %v1910, 0
        %v1976 = vsel %vm1938, %v1911, 0
        %v1979 = vsel %vm1938, %v1912, 0
        %v1982 = vsel %vm1938, %v1913, 0
        %v1985 = vsel %vm1938, %v1914, 0
        %v1988 = vsel %vm1938, %v1915, 0
        %v1991 = vsel %vm1938, %v1916, 0
        %v1994 = vsel %vm1938, %v1917, 0
        %v1997 = vsel %vm1938, %v1918, 0
        %v2000 = vsel %vm1938, %v1919, 0
        %v2003 = vsel %vm1938, %v1920, 0
        %v2006 = vsel %vm1938, %v1921, 0
        %v2009 = vsel %vm1938, %v1922, 0
        %v2012 = vsel %vm1938, %v1923, 0
        %v2015 = vsel %vm1938, %v1924, 0
        %v2018 = vsel %vm1938, %v1925, 0
        %v2021 = vsel %vm1938, %v1926, 0
        %v2024 = vsel %vm1938, %v1927, 0
        %v2027 = vsel %vm1938, %v1928, 0
        %v2030 = vsel %vm1938, %v1929, 0
        %v2033 = vsel %vm1938, %v1930, 0
        %v2036 = vsel %vm1938, %v1931, 0
        %2038 = vmatprep.subr.mxu0 0.0
        %2039 = vmatpush1.xpose.msra.mxu0 %v1988
        %2040 = vmatprep.subr.mxu0 0.0
        %2041 = vmatpush1.xpose.msra.mxu0 %v1985
        %2042 = vmatprep.subr.mxu0 0.0
        %2043 = vmatpush1.xpose.msra.mxu0 %v1982
        %2044 = vmatprep.subr.mxu0 0.0
        %2045 = vmatpush1.xpose.msra.mxu0 %v1979
        %2046 = vmatprep.subr.mxu0 0.0
        %2047 = vmatpush1.xpose.msra.mxu0 %v1976
        %2048 = vmatprep.subr.mxu0 0.0
        %2049 = vmatpush1.xpose.msra.mxu0 %v1973
        %2050 = vmatprep.subr.mxu0 0.0
        %2051 = vmatpush1.xpose.msra.mxu0 %v1970
        %2052 = vmatprep.subr.mxu0 0.0
        %2053 = vmatpush1.xpose.msra.mxu0 %v1967
        %2054 = vmatprep.subr.mxu0 0.0
        %2055 = vmatpush1.xpose.msra.mxu0 %v1964
        %2056 = vmatprep.subr.mxu0 0.0
        %2057 = vmatpush1.xpose.msra.mxu0 %v1961
        %2058 = vmatprep.subr.mxu0 0.0
        %2059 = vmatpush1.xpose.msra.mxu0 %v1958
        %2060 = vmatprep.subr.mxu0 0.0
        %2061 = vmatpush1.xpose.msra.mxu0 %v1955
        %2062 = vmatprep.subr.mxu0 0.0
        %2063 = vmatpush1.xpose.msra.mxu0 %v1952
        %2064 = vmatprep.subr.mxu0 0.0
        %2065 = vmatpush1.xpose.msra.mxu0 %v1949
        %2066 = vmatprep.subr.mxu0 0.0
        %2067 = vmatpush1.xpose.msra.mxu0 %v1946
        %2068 = vmatprep.subr.mxu0 0.0
        %2069 = vmatpush1.xpose.msra.mxu0 %v1943
        %2070 = vmatprep.subr.mxu0 0.0
        %2071 = vmatpush2.xpose.msra.mxu0 %v2036
        %2072 = vmatprep.subr.mxu0 0.0
        %2073 = vmatpush2.xpose.msra.mxu0 %v2033
        %2074 = vmatprep.subr.mxu0 0.0
        %2075 = vmatpush2.xpose.msra.mxu0 %v2030
        %2076 = vmatprep.subr.mxu0 0.0
        %2077 = vmatpush2.xpose.msra.mxu0 %v2027
        %2078 = vmatprep.subr.mxu0 0.0
        %2079 = vmatpush2.xpose.msra.mxu0 %v2024
        %2080 = vmatprep.subr.mxu0 0.0
        %2081 = vmatpush2.xpose.msra.mxu0 %v2021
        %2082 = vmatprep.subr.mxu0 0.0
        %2083 = vmatpush2.xpose.msra.mxu0 %v2018
        %2084 = vmatprep.subr.mxu0 0.0
        %2085 = vmatpush2.xpose.msra.mxu0 %v2015
        %2086 = vmatprep.subr.mxu0 0.0
        %2087 = vmatpush2.xpose.msra.mxu0 %v2012
        %2088 = vmatprep.subr.mxu0 0.0
        %2089 = vmatpush2.xpose.msra.mxu0 %v2009
        %2090 = vmatprep.subr.mxu0 0.0
        %2091 = vmatpush2.xpose.msra.mxu0 %v2006
        %2092 = vmatprep.subr.mxu0 0.0
        %2093 = vmatpush2.xpose.msra.mxu0 %v2003
        %2094 = vmatprep.subr.mxu0 0.0
        %2095 = vmatpush2.xpose.msra.mxu0 %v2000
        %2096 = vmatprep.subr.mxu0 0.0
        %2097 = vmatpush2.xpose.msra.mxu0 %v1997
        %2098 = vmatprep.subr.mxu0 0.0
        %2099 = vmatpush2.xpose.msra.mxu0 %v1994
        %2100 = vmatprep.subr.mxu0 0.0
        %2101 = vmatpush2.xpose.msra.mxu0 %v1991
        %2102 = vmatprep.mubr.f32.mxu0 0.0
        %2103 = vmatmul.mubr.f32.gmra.mxu0 %v1940
        %v2104 = vpop.f32.mrf.mxu0
        %v2105 = vadd.f32 %v1936, %v2104
        %v2106 = vpop.f32.mrf.mxu0
        %v2107 = vadd.f32 %v1936, %v2106
        %2108 = vdwg.mxu0
        %2109 = vst [vmem:[%s163] sm:$0xff] %v2105
        %2110 = vst [vmem:[%s163 + $0x8] sm:$0xff] %v2107
        %s2111 = sand.u32 %s93, 1
        %s2112 = scalar_lea.sflag [#allocation5], %s2111
        %s2113 = sand.u32 %s93, 1
        %s2114 = smul.addr %s2113, 16
        %s2115 = scalar_lea.vmem [#allocation4], %s2114
        // Predicated region
        $region33: #{tpu_custom_call.1} parent=31 // pred_check
          %p2116 = pneg %p103
        $region34: #{tpu_custom_call.1} parent=31 // pred_check_branch
          %2118 = sbr.rel (%p2116) target = $region36
        $region35: #{tpu_custom_call.1} parent=31 // pred_region
          %s2120 = ssub.s32 256, 256
          %2121 = vsyncadd %s2112, %s2120
          %s2122 = smul.addr %s17, 2
          %s2123 = smul.addr %s2122, 128
          %s2124 = scalar_lea.hbm %s3, %s2123
          %s2126 = sshll.u32 %s2115, 4
          %s2127 = int_to_ptr.vmem [resolvable:$true] %s2126
          %2129 = dma.vmem_to_hbm [thread:$0]  %s2127, 256, %s2124, %s2112
        $region36: #{tpu_custom_call.1} parent=31 // pred_fallthru
          _
      $region32: #{tpu_custom_call.1} parent=5 // pred_fallthru
        _
      %p2130 = scmp.le.s32.totalorder 2, %s12
      // Predicated region
      $region37: #{tpu_custom_call.1} parent=5 // pred_check
        %p2131 = pneg %p2130
      $region38: #{tpu_custom_call.1} parent=5 // pred_check_branch
        %2133 = sbr.rel (%p2131) target = $region40
      $region39: #{tpu_custom_call.1} parent=5 // pred_region
        %s2134 = ssub.s32 %s12, 2
        // Predicated region
        $region41: #{tpu_custom_call.1} parent=39 // pred_check
          %p2135 = pneg %p109
        $region42: #{tpu_custom_call.1} parent=39 // pred_check_branch
          %2137 = sbr.rel (%p2135) target = $region44
        $region43: #{tpu_custom_call.1} parent=39 // pred_region
          %s2138 = sand.u32 %s94, 1
          %s2139 = scalar_lea.sflag [#allocation5], %s2138
          %s2140 = sand.u32 %s94, 1
          %s2141 = smul.addr %s2140, 16
          %s2142 = scalar_lea.vmem [#allocation4], %s2141
          %2143 = dma.done %s2139, 256
        $region44: #{tpu_custom_call.1} parent=39 // pred_fallthru
          _
      $region40: #{tpu_custom_call.1} parent=5 // pred_fallthru
        _
    $region6: #{tpu_custom_call.1} parent=1 // loop_footer
      %s16 = sadd.s32 1, %s12
    $region7: #{tpu_custom_call.1} parent=1 // loop_footer_branch
      %11 = sbr.rel target = $region3
    $region8: #{tpu_custom_call.1} parent=1 // loop_exit
      _
    %2144 = vsyncpa [#allocation5], 1
    %s2145 = scalar_lea.sflag [#allocation5], 1
    %2146 = vsyncpa %s2145, 1

</llo_original>
